<compile_context>
chip_gen: v7x
topology: tpu7x:2x2x1
jax: 0.10.0
libtpu: 0.0.40
codegen_flags: <defaults>
</compile_context>

<pallas_src>
import jax
import jax.numpy as jnp
from jax import lax
from jax.experimental import pallas as pl
from jax.experimental.pallas import tpu as pltpu

N_CLASSES = 20
K_PAD = 128  # lane-dense class dimension (multiple of 128)

# (name, planes, num_blocks, stride, dilation) -- stride=16 config: strides=(2,2,2,1)
LAYER_CFG = [
    ("layer1", 64, 3, 1, 1),
    ("layer2", 128, 4, 2, 1),
    ("layer3", 256, 6, 2, 1),
    ("layer4", 512, 3, 1, 1),
]


# ----------------------------------------------------------------------------
# Plain-JAX backbone glue (ResNet-50, eval-mode BatchNorm, NHWC / HWIO layout)
# TODO(synk): spatial 7x7/3x3 convs, BN and maxpool have no clean small Pallas
#             equivalent; they remain XLA ops feeding the Pallas CAM head.
# ----------------------------------------------------------------------------
def conv(x, w, stride=1, padding=0, dilation=1):
    # NHWC activations, HWIO weights (TPU-native layout).
    return lax.conv_general_dilated(
        x, w,
        window_strides=(stride, stride),
        padding=[(padding, padding), (padding, padding)],
        rhs_dilation=(dilation, dilation),
        dimension_numbers=("NHWC", "HWIO", "NHWC"))


def batchnorm(x, p, eps=1e-5):
    # eval-mode BN, channel-last broadcast
    gamma, beta, mean, var = p
    inv = gamma / jnp.sqrt(var + eps)
    return x * inv + (beta - mean * inv)


def maxpool3x3s2(x):
    return lax.reduce_window(
        x, -jnp.inf, lax.max,
        window_dimensions=(1, 3, 3, 1),
        window_strides=(1, 2, 2, 1),
        padding=((0, 0), (1, 1), (1, 1), (0, 0)))


def bottleneck_fwd(x, p, stride, dilation):
    identity = x
    out = jax.nn.relu(batchnorm(conv(x, p["conv1"]), p["bn1"]))
    out = jax.nn.relu(batchnorm(
        conv(out, p["conv2"], stride=stride, padding=dilation, dilation=dilation),
        p["bn2"]))
    out = batchnorm(conv(out, p["conv3"]), p["bn3"])
    if "down_conv" in p:
        identity = batchnorm(conv(x, p["down_conv"], stride=stride), p["down_bn"])
    return jax.nn.relu(out + identity)


def backbone(x_nchw, params):
    # Input kept NCHW to match the PyTorch spec; the 3-channel entry transpose
    # is tiny and fuses under jit.  Everything downstream is channels-last.
    x = jnp.transpose(x_nchw, (0, 2, 3, 1))
    x = jax.nn.relu(batchnorm(conv(x, params["conv1"], stride=2, padding=3),
                              params["bn1"]))
    x = maxpool3x3s2(x)
    for name, _planes, blocks, stride, dilation in LAYER_CFG:
        for bi in range(blocks):
            s = stride if bi == 0 else 1
            x = bottleneck_fwd(x, params[name][bi], s, dilation)
    return x  # (B, H/16, W/16, 2048) channels-last


# ----------------------------------------------------------------------------
# Deterministic parameter init (He-style normal; BN = identity running stats)
# ----------------------------------------------------------------------------
class KeyGen:
    def __init__(self, key):
        self.key = key

    def __call__(self):
        self.key, sub = jax.random.split(self.key)
        return sub


def conv_w(kg, out_c, in_c, k):
    # HWIO layout, built once at init (no per-call transpose).
    fan_in = in_c * k * k
    return jax.random.normal(kg(), (k, k, in_c, out_c), jnp.float32) \
        * jnp.sqrt(2.0 / fan_in)


def bn_p(c):
    return (jnp.ones((c,), jnp.float32), jnp.zeros((c,), jnp.float32),
            jnp.zeros((c,), jnp.float32), jnp.ones((c,), jnp.float32))


def make_bottleneck(kg, inplanes, planes, downsample):
    p = {"conv1": conv_w(kg, planes, inplanes, 1), "bn1": bn_p(planes),
         "conv2": conv_w(kg, planes, planes, 3),   "bn2": bn_p(planes),
         "conv3": conv_w(kg, planes * 4, planes, 1), "bn3": bn_p(planes * 4)}
    if downsample:
        p["down_conv"] = conv_w(kg, planes * 4, inplanes, 1)
        p["down_bn"] = bn_p(planes * 4)
    return p


def init_cam_params(key, n_classes=N_CLASSES):
    kg = KeyGen(key)
    params = {"conv1": conv_w(kg, 64, 3, 7), "bn1": bn_p(64)}
    inplanes = 64
    for name, planes, blocks, _stride, _dilation in LAYER_CFG:
        layer = [make_bottleneck(kg, inplanes, planes, downsample=True)]
        inplanes = planes * 4
        for _ in range(1, blocks):
            layer.append(make_bottleneck(kg, inplanes, planes, downsample=False))
        params[name] = layer
    # nn.Conv2d(2048, n_classes, 1, bias=False) -- kept in (K, C, 1, 1) like torch
    params["classifier"] = jax.random.normal(
        kg(), (n_classes, 2048, 1, 1), jnp.float32) * jnp.sqrt(2.0 / 2048)
    return params


# ----------------------------------------------------------------------------
# Pallas kernel: fused 1x1-conv (channel matmul) + ReLU + add
# (W-flip of image 1 already applied to the features in the wrapper; a spatial
#  permutation commutes with the pointwise 1x1 conv and ReLU.)
# ----------------------------------------------------------------------------
def cam_head_kernel(feat_ref, w_ref, out_ref):
    """feat_ref: (2, tm, C) bf16 -- [image0 rows, image1 rows already W-flipped]
    w_ref:    (C, K_PAD)  bf16 -- classifier weight, zero-padded lanes
    out_ref:  (tm, K_PAD) f32  -- relu(x0 @ W) + relu(x1_flipped @ W)
    """
    w = w_ref[...]
    y0 = jnp.dot(feat_ref[0], w, preferred_element_type=jnp.float32)
    y1 = jnp.dot(feat_ref[1], w, preferred_element_type=jnp.float32)
    out_ref[...] = jnp.maximum(y0, 0.0) + jnp.maximum(y1, 0.0)


def prepare_classifier_matrix(classifier_w, k_pad=K_PAD):
    """(K, C, 1, 1) conv weight -> (C, k_pad) bf16, zero lane-padded.  Call ONCE."""
    K, C = classifier_w.shape[:2]
    w_ck = jnp.asarray(classifier_w.reshape(K, C).T, dtype=jnp.bfloat16)  # (C, K)
    return jnp.pad(w_ck, ((0, 0), (0, k_pad - K)))                        # (C, 128)


def _pick_row_tile(hw):
    # Whole array for tiny heads; >=256-row tiles (multiple of 8) when big
    # enough to keep MXU passes full and VMEM bounded (v7x: 64 MiB).
    if hw <= 512:
        return hw
    for t in (512, 256, 128):
        if hw % t == 0:
            return t
    return hw  # TODO(synk): ragged H*W; fall back to whole-array (raise vmem limit)


def cam_head(feat_nhwc, w_ck, n_classes=N_CLASSES):
    """relu(conv1x1(feat, W_cls))[0] + relu(conv1x1(feat, W_cls))[1].flip(W)."""
    B, H, W, C = feat_nhwc.shape
    assert B == 2, "CAM forward assumes a 2-image batch (image + its flip)"
    k_pad = w_ck.shape[1]
    hw = H * W

    # W-flip of image 1 applied HERE on channels-last features: pure gather,
    # fuses with the bf16 cast + reshape under jit (no kernel-side permutation).
    feat = jnp.concatenate([feat_nhwc[:1], feat_nhwc[1:, :, ::-1, :]], axis=0)
    feat = feat.reshape(2, hw, C).astype(jnp.bfloat16)

    tm = _pick_row_tile(hw)
    grid = (hw // tm,)

    cost = pl.CostEstimate(
        flops=2 * (2 * hw) * C * k_pad,
        transcendentals=0,
        bytes_accessed=2 * hw * C * 2 + C * k_pad * 2 + hw * k_pad * 4)

    out_flat = pl.pallas_call(
        cam_head_kernel,
        out_shape=jax.ShapeDtypeStruct((hw, k_pad), jnp.float32),
        grid_spec=pltpu.PrefetchScalarGridSpec(
            num_scalar_prefetch=0,
            grid=grid,
            in_specs=[
                pl.BlockSpec((2, tm, C), lambda i: (0, i, 0)),
                pl.BlockSpec((C, k_pad), lambda i: (0, 0)),   # weight resident
            ],
            out_specs=pl.BlockSpec((tm, k_pad), lambda i: (i, 0))),
        compiler_params=pltpu.CompilerParams(
            dimension_semantics=("parallel",)),
        cost_estimate=cost,
    )(feat, w_ck)

    # Drop zero-padded class lanes, (H*W, K) -> (K, H, W); fuses under jit.
    return jnp.transpose(out_flat[:, :n_classes].reshape(H, W, n_classes), (2, 0, 1))


def cam_forward(x, params, w_ck):
    # CAM.forward(x, separate=False): backbone glue + fused Pallas CAM head.
    feat = backbone(x, params)
    return cam_head(feat, w_ck)


# ----------------------------------------------------------------------------
if __name__ == "__main__":
    root = jax.random.PRNGKey(0)
    k_x, k_p = jax.random.split(root)

    params = init_cam_params(k_p, n_classes=N_CLASSES)
    # Classifier weight re-laid-out + lane-padded ONCE, outside the hot path.
    w_ck = prepare_classifier_matrix(params["classifier"])       # (2048, 128) bf16

    x = jax.random.normal(k_x, (2, 3, 64, 64), jnp.float32)      # NCHW batch of 2

    # Whole forward (backbone + Pallas CAM head) under a single jit.
    cam_forward_jit = jax.jit(cam_forward)
    out = cam_forward_jit(x, params, w_ck)                       # (20, 4, 4)
    out = jax.block_until_ready(out)

    # ----- sanity check against a pure-JAX reference of the CAM head --------
    feat = jax.jit(backbone)(x, params)                          # (2, 4, 4, 2048) NHWC
    featb = feat.astype(jnp.bfloat16).astype(jnp.float32)        # kernel sees bf16
    wb = w_ck[:, :N_CLASSES].astype(jnp.float32)                 # (2048, 20)
    y = jnp.maximum(
        jnp.einsum("bhwc,ck->bkhw", featb, wb,
                   precision=lax.Precision.HIGHEST), 0.0)
    ref = y[0] + y[1][:, :, ::-1]                                # flip last dim (W)

    assert out.shape == (N_CLASSES, feat.shape[1], feat.shape[2]), out.shape
    rel_err = float(jnp.max(jnp.abs(out - ref)) / (jnp.max(jnp.abs(ref)) + 1e-6))
    assert rel_err < 1e-3, f"mismatch vs reference, rel_err={rel_err}"

    print("KERNEL_OK")
</pallas_src>

<mosaic_0001>
module attributes {stable_mosaic.version = 11 : i64} {
  func.func @cam_head_kernel(%arg0: i32, %arg1: memref<2x16x2048xbf16, #tpu.memory_space<vmem>>, %arg2: memref<2048x128xbf16, #tpu.memory_space<vmem>>, %arg3: memref<16x128xf32, #tpu.memory_space<vmem>>) attributes {dimension_semantics = [#tpu.dimension_semantics<parallel>], iteration_bounds = array<i64: 1>, scalar_prefetch = 0 : i64, scratch_operands = 0 : i64, tpu.core_type = #tpu.core_type<tc>, window_params = [{transform_indices = @transform_0, window_bounds = array<i64: 2, 16, 2048>}, {pipeline_mode = #tpu.pipeline_mode<synchronous>, transform_indices = @transform_1, window_bounds = array<i64: 2048, 128>}, {transform_indices = @transform_2, window_bounds = array<i64: 16, 128>}]} {
    %c0 = arith.constant 0 : index
    %c0_0 = arith.constant 0 : index
    %0 = vector.load %arg2[%c0, %c0_0] : memref<2048x128xbf16, #tpu.memory_space<vmem>>, vector<2048x128xbf16>
    %c0_1 = arith.constant 0 : index
    %c0_2 = arith.constant 0 : index
    %c0_3 = arith.constant 0 : index
    %1 = vector.load %arg1[%c0_1, %c0_2, %c0_3] : memref<2x16x2048xbf16, #tpu.memory_space<vmem>>, vector<1x16x2048xbf16>
    %2 = vector.shape_cast %1 : vector<1x16x2048xbf16> to vector<16x2048xbf16>
    %cst = arith.constant dense<0.000000e+00> : vector<16x128xf32>
    %3 = tpu.matmul %2, %0, %cst {dimension_numbers = #tpu.dot_dimension_numbers<[1], [0], [0], [1], [0, 0, 1, 1], [], []>} : vector<16x2048xbf16>, vector<2048x128xbf16>, vector<16x128xf32> -> vector<16x128xf32>
    %c1 = arith.constant 1 : index
    %c0_4 = arith.constant 0 : index
    %c0_5 = arith.constant 0 : index
    %4 = vector.load %arg1[%c1, %c0_4, %c0_5] : memref<2x16x2048xbf16, #tpu.memory_space<vmem>>, vector<1x16x2048xbf16>
    %5 = vector.shape_cast %4 : vector<1x16x2048xbf16> to vector<16x2048xbf16>
    %cst_6 = arith.constant dense<0.000000e+00> : vector<16x128xf32>
    %6 = tpu.matmul %5, %0, %cst_6 {dimension_numbers = #tpu.dot_dimension_numbers<[1], [0], [0], [1], [0, 0, 1, 1], [], []>} : vector<16x2048xbf16>, vector<2048x128xbf16>, vector<16x128xf32> -> vector<16x128xf32>
    %cst_7 = arith.constant 0.000000e+00 : f32
    %7 = vector.broadcast %cst_7 : f32 to vector<16x128xf32>
    %8 = arith.maximumf %3, %7 : vector<16x128xf32>
    %cst_8 = arith.constant 0.000000e+00 : f32
    %9 = vector.broadcast %cst_8 : f32 to vector<16x128xf32>
    %10 = arith.maximumf %6, %9 : vector<16x128xf32>
    %11 = arith.addf %8, %10 : vector<16x128xf32>
    %c0_9 = arith.constant 0 : index
    %c0_10 = arith.constant 0 : index
    %12 = vector.load %arg3[%c0_9, %c0_10] : memref<16x128xf32, #tpu.memory_space<vmem>>, vector<16x128xf32>
    tpu.vector_store %arg3[%c0_9, %c0_10], %11 {strides = array<i32>} : memref<16x128xf32, #tpu.memory_space<vmem>>, vector<16x128xf32>,
    return
  }
  func.func @transform_0(%arg0: i32) -> (i32, i32, i32) {
    %c0_i32 = arith.constant 0 : i32
    %c0_i32_0 = arith.constant 0 : i32
    %c0_i32_1 = arith.constant 0 : i32
    return %c0_i32, %arg0, %c0_i32_0 : i32, i32, i32
  }
  func.func @transform_1(%arg0: i32) -> (i32, i32) {
    %c0_i32 = arith.constant 0 : i32
    %c0_i32_0 = arith.constant 0 : i32
    %c0_i32_1 = arith.constant 0 : i32
    return %c0_i32, %c0_i32_0 : i32, i32
  }
  func.func @transform_2(%arg0: i32) -> (i32, i32) {
    %c0_i32 = arith.constant 0 : i32
    %c0_i32_0 = arith.constant 0 : i32
    return %arg0, %c0_i32 : i32, i32
  }
}

</mosaic_0001>

<llo_original>
// kernel: cam_forward.1
$region0: #{cam_forward.1}
  #allocation0 [shape = 'u32[]', space=smem, size = 0x4, offset = 0x4, fixed_abs, tag = 'smem constant byte address 0x4 - core index']
  #allocation1 [shape = 'u32[144,128]{1,0:T(1,128)}', space=vmem, size = 0x12000, scoped, tag = 'internal scratch']
  %s0 = inlined_call_operand.vmem [shape: bf16[2,16,2048], index: 0, kind: input, shape index: {}]
  %s1 = inlined_call_operand.vmem [shape: bf16[2048,128], index: 1, kind: input, shape index: {}]
  %s2 = inlined_call_operand.hbm [shape: f32[16,128], index: 2, kind: output, shape index: {}]
  %s3 = sld [smem:[#allocation0]]
  $region18: #{cam_forward.1} parent=0
    _
  %s5 = ssub.s32 1, %s3
  %s6 = scalar_select 0, %s5, %s3
  $region1: #{cam_forward.1} parent=0
    #allocation2 [shape = 'u8[8192]{0}', space=vmem, size = 0x2000, scoped, tag = 'output window, operand 0, single buffered']
    #allocation3 [shape = 's32[1]{0}', space=sflag, size = 0x4, scoped, tag = 'scoped memory for cam_forward.1']
    %7 = vsyncpa [#allocation3], 0
    // Predicated region
    $region2: #{cam_forward.1} parent=1 // pred_check
      _
    $region3: #{cam_forward.1} parent=1 // pred_check_branch
      %9 = sbr.rel (0) target = $region5
    $region4: #{cam_forward.1} parent=1 // pred_region
      _
    $region5: #{cam_forward.1} parent=1 // pred_fallthru
      _
    // Predicated region
    $region6: #{cam_forward.1} parent=1 // pred_check
      _
    $region7: #{cam_forward.1} parent=1 // pred_check_branch
      %11 = sbr.rel (0) target = $region9
    $region8: #{cam_forward.1} parent=1 // pred_region
      _
    $region9: #{cam_forward.1} parent=1 // pred_fallthru
      _
    %v13 = vld [vmem:[%s1] sm:$0xf]
    %v14 = vld [vmem:[%s1 + $0x4] sm:$0xf]
    %v15 = vld [vmem:[%s1 + $0x8] sm:$0xf]
    %v16 = vld [vmem:[%s1 + $0xc] sm:$0xf]
    %v17 = vld [vmem:[%s1 + $0x10] sm:$0xf]
    %v18 = vld [vmem:[%s1 + $0x14] sm:$0xf]
    %v19 = vld [vmem:[%s1 + $0x18] sm:$0xf]
    %v20 = vld [vmem:[%s1 + $0x1c] sm:$0xf]
    %v21 = vld [vmem:[%s1 + $0x20] sm:$0xf]
    %v22 = vld [vmem:[%s1 + $0x24] sm:$0xf]
    %v23 = vld [vmem:[%s1 + $0x28] sm:$0xf]
    %v24 = vld [vmem:[%s1 + $0x2c] sm:$0xf]
    %v25 = vld [vmem:[%s1 + $0x30] sm:$0xf]
    %v26 = vld [vmem:[%s1 + $0x34] sm:$0xf]
    %v27 = vld [vmem:[%s1 + $0x38] sm:$0xf]
    %v28 = vld [vmem:[%s1 + $0x3c] sm:$0xf]
    %v29 = vld [vmem:[%s1 + $0x40] sm:$0xf]
    %v30 = vld [vmem:[%s1 + $0x44] sm:$0xf]
    %v31 = vld [vmem:[%s1 + $0x48] sm:$0xf]
    %v32 = vld [vmem:[%s1 + $0x4c] sm:$0xf]
    %v33 = vld [vmem:[%s1 + $0x50] sm:$0xf]
    %v34 = vld [vmem:[%s1 + $0x54] sm:$0xf]
    %v35 = vld [vmem:[%s1 + $0x58] sm:$0xf]
    %v36 = vld [vmem:[%s1 + $0x5c] sm:$0xf]
    %v37 = vld [vmem:[%s1 + $0x60] sm:$0xf]
    %v38 = vld [vmem:[%s1 + $0x64] sm:$0xf]
    %v39 = vld [vmem:[%s1 + $0x68] sm:$0xf]
    %v40 = vld [vmem:[%s1 + $0x6c] sm:$0xf]
    %v41 = vld [vmem:[%s1 + $0x70] sm:$0xf]
    %v42 = vld [vmem:[%s1 + $0x74] sm:$0xf]
    %v43 = vld [vmem:[%s1 + $0x78] sm:$0xf]
    %v44 = vld [vmem:[%s1 + $0x7c] sm:$0xf]
    %v45 = vld [vmem:[%s1 + $0x80] sm:$0xf]
    %v46 = vld [vmem:[%s1 + $0x84] sm:$0xf]
    %v47 = vld [vmem:[%s1 + $0x88] sm:$0xf]
    %v48 = vld [vmem:[%s1 + $0x8c] sm:$0xf]
    %v49 = vld [vmem:[%s1 + $0x90] sm:$0xf]
    %v50 = vld [vmem:[%s1 + $0x94] sm:$0xf]
    %v51 = vld [vmem:[%s1 + $0x98] sm:$0xf]
    %v52 = vld [vmem:[%s1 + $0x9c] sm:$0xf]
    %v53 = vld [vmem:[%s1 + $0xa0] sm:$0xf]
    %v54 = vld [vmem:[%s1 + $0xa4] sm:$0xf]
    %v55 = vld [vmem:[%s1 + $0xa8] sm:$0xf]
    %v56 = vld [vmem:[%s1 + $0xac] sm:$0xf]
    %v57 = vld [vmem:[%s1 + $0xb0] sm:$0xf]
    %v58 = vld [vmem:[%s1 + $0xb4] sm:$0xf]
    %v59 = vld [vmem:[%s1 + $0xb8] sm:$0xf]
    %v60 = vld [vmem:[%s1 + $0xbc] sm:$0xf]
    %v61 = vld [vmem:[%s1 + $0xc0] sm:$0xf]
    %v62 = vld [vmem:[%s1 + $0xc4] sm:$0xf]
    %v63 = vld [vmem:[%s1 + $0xc8] sm:$0xf]
    %v64 = vld [vmem:[%s1 + $0xcc] sm:$0xf]
    %v65 = vld [vmem:[%s1 + $0xd0] sm:$0xf]
    %v66 = vld [vmem:[%s1 + $0xd4] sm:$0xf]
    %v67 = vld [vmem:[%s1 + $0xd8] sm:$0xf]
    %v68 = vld [vmem:[%s1 + $0xdc] sm:$0xf]
    %v69 = vld [vmem:[%s1 + $0xe0] sm:$0xf]
    %v70 = vld [vmem:[%s1 + $0xe4] sm:$0xf]
    %v71 = vld [vmem:[%s1 + $0xe8] sm:$0xf]
    %v72 = vld [vmem:[%s1 + $0xec] sm:$0xf]
    %v73 = vld [vmem:[%s1 + $0xf0] sm:$0xf]
    %v74 = vld [vmem:[%s1 + $0xf4] sm:$0xf]
    %v75 = vld [vmem:[%s1 + $0xf8] sm:$0xf]
    %v76 = vld [vmem:[%s1 + $0xfc] sm:$0xf]
    %v77 = vld [vmem:[%s1 + $0x100] sm:$0xf]
    %v78 = vld [vmem:[%s1 + $0x104] sm:$0xf]
    %v79 = vld [vmem:[%s1 + $0x108] sm:$0xf]
    %v80 = vld [vmem:[%s1 + $0x10c] sm:$0xf]
    %v81 = vld [vmem:[%s1 + $0x110] sm:$0xf]
    %v82 = vld [vmem:[%s1 + $0x114] sm:$0xf]
    %v83 = vld [vmem:[%s1 + $0x118] sm:$0xf]
    %v84 = vld [vmem:[%s1 + $0x11c] sm:$0xf]
    %v85 = vld [vmem:[%s1 + $0x120] sm:$0xf]
    %v86 = vld [vmem:[%s1 + $0x124] sm:$0xf]
    %v87 = vld [vmem:[%s1 + $0x128] sm:$0xf]
    %v88 = vld [vmem:[%s1 + $0x12c] sm:$0xf]
    %v89 = vld [vmem:[%s1 + $0x130] sm:$0xf]
    %v90 = vld [vmem:[%s1 + $0x134] sm:$0xf]
    %v91 = vld [vmem:[%s1 + $0x138] sm:$0xf]
    %v92 = vld [vmem:[%s1 + $0x13c] sm:$0xf]
    %v93 = vld [vmem:[%s1 + $0x140] sm:$0xf]
    %v94 = vld [vmem:[%s1 + $0x144] sm:$0xf]
    %v95 = vld [vmem:[%s1 + $0x148] sm:$0xf]
    %v96 = vld [vmem:[%s1 + $0x14c] sm:$0xf]
    %v97 = vld [vmem:[%s1 + $0x150] sm:$0xf]
    %v98 = vld [vmem:[%s1 + $0x154] sm:$0xf]
    %v99 = vld [vmem:[%s1 + $0x158] sm:$0xf]
    %v100 = vld [vmem:[%s1 + $0x15c] sm:$0xf]
    %v101 = vld [vmem:[%s1 + $0x160] sm:$0xf]
    %v102 = vld [vmem:[%s1 + $0x164] sm:$0xf]
    %v103 = vld [vmem:[%s1 + $0x168] sm:$0xf]
    %v104 = vld [vmem:[%s1 + $0x16c] sm:$0xf]
    %v105 = vld [vmem:[%s1 + $0x170] sm:$0xf]
    %v106 = vld [vmem:[%s1 + $0x174] sm:$0xf]
    %v107 = vld [vmem:[%s1 + $0x178] sm:$0xf]
    %v108 = vld [vmem:[%s1 + $0x17c] sm:$0xf]
    %v109 = vld [vmem:[%s1 + $0x180] sm:$0xf]
    %v110 = vld [vmem:[%s1 + $0x184] sm:$0xf]
    %v111 = vld [vmem:[%s1 + $0x188] sm:$0xf]
    %v112 = vld [vmem:[%s1 + $0x18c] sm:$0xf]
    %v113 = vld [vmem:[%s1 + $0x190] sm:$0xf]
    %v114 = vld [vmem:[%s1 + $0x194] sm:$0xf]
    %v115 = vld [vmem:[%s1 + $0x198] sm:$0xf]
    %v116 = vld [vmem:[%s1 + $0x19c] sm:$0xf]
    %v117 = vld [vmem:[%s1 + $0x1a0] sm:$0xf]
    %v118 = vld [vmem:[%s1 + $0x1a4] sm:$0xf]
    %v119 = vld [vmem:[%s1 + $0x1a8] sm:$0xf]
    %v120 = vld [vmem:[%s1 + $0x1ac] sm:$0xf]
    %v121 = vld [vmem:[%s1 + $0x1b0] sm:$0xf]
    %v122 = vld [vmem:[%s1 + $0x1b4] sm:$0xf]
    %v123 = vld [vmem:[%s1 + $0x1b8] sm:$0xf]
    %v124 = vld [vmem:[%s1 + $0x1bc] sm:$0xf]
    %v125 = vld [vmem:[%s1 + $0x1c0] sm:$0xf]
    %v126 = vld [vmem:[%s1 + $0x1c4] sm:$0xf]
    %v127 = vld [vmem:[%s1 + $0x1c8] sm:$0xf]
    %v128 = vld [vmem:[%s1 + $0x1cc] sm:$0xf]
    %v129 = vld [vmem:[%s1 + $0x1d0] sm:$0xf]
    %v130 = vld [vmem:[%s1 + $0x1d4] sm:$0xf]
    %v131 = vld [vmem:[%s1 + $0x1d8] sm:$0xf]
    %v132 = vld [vmem:[%s1 + $0x1dc] sm:$0xf]
    %v133 = vld [vmem:[%s1 + $0x1e0] sm:$0xf]
    %v134 = vld [vmem:[%s1 + $0x1e4] sm:$0xf]
    %v135 = vld [vmem:[%s1 + $0x1e8] sm:$0xf]
    %v136 = vld [vmem:[%s1 + $0x1ec] sm:$0xf]
    %v137 = vld [vmem:[%s1 + $0x1f0] sm:$0xf]
    %v138 = vld [vmem:[%s1 + $0x1f4] sm:$0xf]
    %v139 = vld [vmem:[%s1 + $0x1f8] sm:$0xf]
    %v140 = vld [vmem:[%s1 + $0x1fc] sm:$0xf]
    %v141 = vld [vmem:[%s1 + $0x200] sm:$0xf]
    %v142 = vld [vmem:[%s1 + $0x204] sm:$0xf]
    %v143 = vld [vmem:[%s1 + $0x208] sm:$0xf]
    %v144 = vld [vmem:[%s1 + $0x20c] sm:$0xf]
    %v145 = vld [vmem:[%s1 + $0x210] sm:$0xf]
    %v146 = vld [vmem:[%s1 + $0x214] sm:$0xf]
    %v147 = vld [vmem:[%s1 + $0x218] sm:$0xf]
    %v148 = vld [vmem:[%s1 + $0x21c] sm:$0xf]
    %v149 = vld [vmem:[%s1 + $0x220] sm:$0xf]
    %v150 = vld [vmem:[%s1 + $0x224] sm:$0xf]
    %v151 = vld [vmem:[%s1 + $0x228] sm:$0xf]
    %v152 = vld [vmem:[%s1 + $0x22c] sm:$0xf]
    %v153 = vld [vmem:[%s1 + $0x230] sm:$0xf]
    %v154 = vld [vmem:[%s1 + $0x234] sm:$0xf]
    %v155 = vld [vmem:[%s1 + $0x238] sm:$0xf]
    %v156 = vld [vmem:[%s1 + $0x23c] sm:$0xf]
    %v157 = vld [vmem:[%s1 + $0x240] sm:$0xf]
    %v158 = vld [vmem:[%s1 + $0x244] sm:$0xf]
    %v159 = vld [vmem:[%s1 + $0x248] sm:$0xf]
    %v160 = vld [vmem:[%s1 + $0x24c] sm:$0xf]
    %v161 = vld [vmem:[%s1 + $0x250] sm:$0xf]
    %v162 = vld [vmem:[%s1 + $0x254] sm:$0xf]
    %v163 = vld [vmem:[%s1 + $0x258] sm:$0xf]
    %v164 = vld [vmem:[%s1 + $0x25c] sm:$0xf]
    %v165 = vld [vmem:[%s1 + $0x260] sm:$0xf]
    %v166 = vld [vmem:[%s1 + $0x264] sm:$0xf]
    %v167 = vld [vmem:[%s1 + $0x268] sm:$0xf]
    %v168 = vld [vmem:[%s1 + $0x26c] sm:$0xf]
    %v169 = vld [vmem:[%s1 + $0x270] sm:$0xf]
    %v170 = vld [vmem:[%s1 + $0x274] sm:$0xf]
    %v171 = vld [vmem:[%s1 + $0x278] sm:$0xf]
    %v172 = vld [vmem:[%s1 + $0x27c] sm:$0xf]
    %v173 = vld [vmem:[%s1 + $0x280] sm:$0xf]
    %v174 = vld [vmem:[%s1 + $0x284] sm:$0xf]
    %v175 = vld [vmem:[%s1 + $0x288] sm:$0xf]
    %v176 = vld [vmem:[%s1 + $0x28c] sm:$0xf]
    %v177 = vld [vmem:[%s1 + $0x290] sm:$0xf]
    %v178 = vld [vmem:[%s1 + $0x294] sm:$0xf]
    %v179 = vld [vmem:[%s1 + $0x298] sm:$0xf]
    %v180 = vld [vmem:[%s1 + $0x29c] sm:$0xf]
    %v181 = vld [vmem:[%s1 + $0x2a0] sm:$0xf]
    %v182 = vld [vmem:[%s1 + $0x2a4] sm:$0xf]
    %v183 = vld [vmem:[%s1 + $0x2a8] sm:$0xf]
    %v184 = vld [vmem:[%s1 + $0x2ac] sm:$0xf]
    %v185 = vld [vmem:[%s1 + $0x2b0] sm:$0xf]
    %v186 = vld [vmem:[%s1 + $0x2b4] sm:$0xf]
    %v187 = vld [vmem:[%s1 + $0x2b8] sm:$0xf]
    %v188 = vld [vmem:[%s1 + $0x2bc] sm:$0xf]
    %v189 = vld [vmem:[%s1 + $0x2c0] sm:$0xf]
    %v190 = vld [vmem:[%s1 + $0x2c4] sm:$0xf]
    %v191 = vld [vmem:[%s1 + $0x2c8] sm:$0xf]
    %v192 = vld [vmem:[%s1 + $0x2cc] sm:$0xf]
    %v193 = vld [vmem:[%s1 + $0x2d0] sm:$0xf]
    %v194 = vld [vmem:[%s1 + $0x2d4] sm:$0xf]
    %v195 = vld [vmem:[%s1 + $0x2d8] sm:$0xf]
    %v196 = vld [vmem:[%s1 + $0x2dc] sm:$0xf]
    %v197 = vld [vmem:[%s1 + $0x2e0] sm:$0xf]
    %v198 = vld [vmem:[%s1 + $0x2e4] sm:$0xf]
    %v199 = vld [vmem:[%s1 + $0x2e8] sm:$0xf]
    %v200 = vld [vmem:[%s1 + $0x2ec] sm:$0xf]
    %v201 = vld [vmem:[%s1 + $0x2f0] sm:$0xf]
    %v202 = vld [vmem:[%s1 + $0x2f4] sm:$0xf]
    %v203 = vld [vmem:[%s1 + $0x2f8] sm:$0xf]
    %v204 = vld [vmem:[%s1 + $0x2fc] sm:$0xf]
    %v205 = vld [vmem:[%s1 + $0x300] sm:$0xf]
    %v206 = vld [vmem:[%s1 + $0x304] sm:$0xf]
    %v207 = vld [vmem:[%s1 + $0x308] sm:$0xf]
    %v208 = vld [vmem:[%s1 + $0x30c] sm:$0xf]
    %v209 = vld [vmem:[%s1 + $0x310] sm:$0xf]
    %v210 = vld [vmem:[%s1 + $0x314] sm:$0xf]
    %v211 = vld [vmem:[%s1 + $0x318] sm:$0xf]
    %v212 = vld [vmem:[%s1 + $0x31c] sm:$0xf]
    %v213 = vld [vmem:[%s1 + $0x320] sm:$0xf]
    %v214 = vld [vmem:[%s1 + $0x324] sm:$0xf]
    %v215 = vld [vmem:[%s1 + $0x328] sm:$0xf]
    %v216 = vld [vmem:[%s1 + $0x32c] sm:$0xf]
    %v217 = vld [vmem:[%s1 + $0x330] sm:$0xf]
    %v218 = vld [vmem:[%s1 + $0x334] sm:$0xf]
    %v219 = vld [vmem:[%s1 + $0x338] sm:$0xf]
    %v220 = vld [vmem:[%s1 + $0x33c] sm:$0xf]
    %v221 = vld [vmem:[%s1 + $0x340] sm:$0xf]
    %v222 = vld [vmem:[%s1 + $0x344] sm:$0xf]
    %v223 = vld [vmem:[%s1 + $0x348] sm:$0xf]
    %v224 = vld [vmem:[%s1 + $0x34c] sm:$0xf]
    %v225 = vld [vmem:[%s1 + $0x350] sm:$0xf]
    %v226 = vld [vmem:[%s1 + $0x354] sm:$0xf]
    %v227 = vld [vmem:[%s1 + $0x358] sm:$0xf]
    %v228 = vld [vmem:[%s1 + $0x35c] sm:$0xf]
    %v229 = vld [vmem:[%s1 + $0x360] sm:$0xf]
    %v230 = vld [vmem:[%s1 + $0x364] sm:$0xf]
    %v231 = vld [vmem:[%s1 + $0x368] sm:$0xf]
    %v232 = vld [vmem:[%s1 + $0x36c] sm:$0xf]
    %v233 = vld [vmem:[%s1 + $0x370] sm:$0xf]
    %v234 = vld [vmem:[%s1 + $0x374] sm:$0xf]
    %v235 = vld [vmem:[%s1 + $0x378] sm:$0xf]
    %v236 = vld [vmem:[%s1 + $0x37c] sm:$0xf]
    %v237 = vld [vmem:[%s1 + $0x380] sm:$0xf]
    %v238 = vld [vmem:[%s1 + $0x384] sm:$0xf]
    %v239 = vld [vmem:[%s1 + $0x388] sm:$0xf]
    %v240 = vld [vmem:[%s1 + $0x38c] sm:$0xf]
    %v241 = vld [vmem:[%s1 + $0x390] sm:$0xf]
    %v242 = vld [vmem:[%s1 + $0x394] sm:$0xf]
    %v243 = vld [vmem:[%s1 + $0x398] sm:$0xf]
    %v244 = vld [vmem:[%s1 + $0x39c] sm:$0xf]
    %v245 = vld [vmem:[%s1 + $0x3a0] sm:$0xf]
    %v246 = vld [vmem:[%s1 + $0x3a4] sm:$0xf]
    %v247 = vld [vmem:[%s1 + $0x3a8] sm:$0xf]
    %v248 = vld [vmem:[%s1 + $0x3ac] sm:$0xf]
    %v249 = vld [vmem:[%s1 + $0x3b0] sm:$0xf]
    %v250 = vld [vmem:[%s1 + $0x3b4] sm:$0xf]
    %v251 = vld [vmem:[%s1 + $0x3b8] sm:$0xf]
    %v252 = vld [vmem:[%s1 + $0x3bc] sm:$0xf]
    %v253 = vld [vmem:[%s1 + $0x3c0] sm:$0xf]
    %v254 = vld [vmem:[%s1 + $0x3c4] sm:$0xf]
    %v255 = vld [vmem:[%s1 + $0x3c8] sm:$0xf]
    %v256 = vld [vmem:[%s1 + $0x3cc] sm:$0xf]
    %v257 = vld [vmem:[%s1 + $0x3d0] sm:$0xf]
    %v258 = vld [vmem:[%s1 + $0x3d4] sm:$0xf]
    %v259 = vld [vmem:[%s1 + $0x3d8] sm:$0xf]
    %v260 = vld [vmem:[%s1 + $0x3dc] sm:$0xf]
    %v261 = vld [vmem:[%s1 + $0x3e0] sm:$0xf]
    %v262 = vld [vmem:[%s1 + $0x3e4] sm:$0xf]
    %v263 = vld [vmem:[%s1 + $0x3e8] sm:$0xf]
    %v264 = vld [vmem:[%s1 + $0x3ec] sm:$0xf]
    %v265 = vld [vmem:[%s1 + $0x3f0] sm:$0xf]
    %v266 = vld [vmem:[%s1 + $0x3f4] sm:$0xf]
    %v267 = vld [vmem:[%s1 + $0x3f8] sm:$0xf]
    %v268 = vld [vmem:[%s1 + $0x3fc] sm:$0xf]
    %v269 = vld [vmem:[%s0] sm:$0xff]
    %v270 = vld [vmem:[%s0 + $0x8] sm:$0xff]
    %v271 = vld [vmem:[%s0 + $0x10] sm:$0xff]
    %v272 = vld [vmem:[%s0 + $0x18] sm:$0xff]
    %v273 = vld [vmem:[%s0 + $0x20] sm:$0xff]
    %v274 = vld [vmem:[%s0 + $0x28] sm:$0xff]
    %v275 = vld [vmem:[%s0 + $0x30] sm:$0xff]
    %v276 = vld [vmem:[%s0 + $0x38] sm:$0xff]
    %v277 = vld [vmem:[%s0 + $0x40] sm:$0xff]
    %v278 = vld [vmem:[%s0 + $0x48] sm:$0xff]
    %v279 = vld [vmem:[%s0 + $0x50] sm:$0xff]
    %v280 = vld [vmem:[%s0 + $0x58] sm:$0xff]
    %v281 = vld [vmem:[%s0 + $0x60] sm:$0xff]
    %v282 = vld [vmem:[%s0 + $0x68] sm:$0xff]
    %v283 = vld [vmem:[%s0 + $0x70] sm:$0xff]
    %v284 = vld [vmem:[%s0 + $0x78] sm:$0xff]
    %v301 = vunpack.c.l.b16 %v269
    %v302 = vunpack.c.h.b16 %v269
    %v303 = vunpack.c.l.b16 %v270
    %v304 = vunpack.c.h.b16 %v270
    %v305 = vunpack.c.l.b16 %v271
    %v306 = vunpack.c.h.b16 %v271
    %v307 = vunpack.c.l.b16 %v272
    %v308 = vunpack.c.h.b16 %v272
    %v309 = vunpack.c.l.b16 %v273
    %v310 = vunpack.c.h.b16 %v273
    %v311 = vunpack.c.l.b16 %v274
    %v312 = vunpack.c.h.b16 %v274
    %v313 = vunpack.c.l.b16 %v275
    %v314 = vunpack.c.h.b16 %v275
    %v315 = vunpack.c.l.b16 %v276
    %v316 = vunpack.c.h.b16 %v276
    %v317 = vunpack.c.l.b16 %v277
    %v318 = vunpack.c.h.b16 %v277
    %v319 = vunpack.c.l.b16 %v278
    %v320 = vunpack.c.h.b16 %v278
    %v321 = vunpack.c.l.b16 %v279
    %v322 = vunpack.c.h.b16 %v279
    %v323 = vunpack.c.l.b16 %v280
    %v324 = vunpack.c.h.b16 %v280
    %v325 = vunpack.c.l.b16 %v281
    %v326 = vunpack.c.h.b16 %v281
    %v327 = vunpack.c.l.b16 %v282
    %v328 = vunpack.c.h.b16 %v282
    %v329 = vunpack.c.l.b16 %v283
    %v330 = vunpack.c.h.b16 %v283
    %v331 = vunpack.c.l.b16 %v284
    %v332 = vunpack.c.h.b16 %v284
    %v333 = vpack.c.b16 %v317, %v301
    %v334 = vpack.c.b16 %v318, %v302
    %v335 = vpack.c.b16 %v319, %v303
    %v336 = vpack.c.b16 %v320, %v304
    %v337 = vpack.c.b16 %v321, %v305
    %v338 = vpack.c.b16 %v322, %v306
    %v339 = vpack.c.b16 %v323, %v307
    %v340 = vpack.c.b16 %v324, %v308
    %v341 = vpack.c.b16 %v325, %v309
    %v342 = vpack.c.b16 %v326, %v310
    %v343 = vpack.c.b16 %v327, %v311
    %v344 = vpack.c.b16 %v328, %v312
    %v345 = vpack.c.b16 %v329, %v313
    %v346 = vpack.c.b16 %v330, %v314
    %v347 = vpack.c.b16 %v331, %v315
    %v348 = vpack.c.b16 %v332, %v316
    %v621 = vunpack.c.l.b16 %v13
    %v622 = vunpack.c.l.b16 %v14
    %v623 = vunpack.c.l.b16 %v15
    %v624 = vunpack.c.l.b16 %v16
    %v625 = vunpack.c.l.b16 %v17
    %v626 = vunpack.c.l.b16 %v18
    %v627 = vunpack.c.l.b16 %v19
    %v628 = vunpack.c.l.b16 %v20
    %v629 = vunpack.c.l.b16 %v21
    %v630 = vunpack.c.l.b16 %v22
    %v631 = vunpack.c.l.b16 %v23
    %v632 = vunpack.c.l.b16 %v24
    %v633 = vunpack.c.l.b16 %v25
    %v634 = vunpack.c.l.b16 %v26
    %v635 = vunpack.c.l.b16 %v27
    %v636 = vunpack.c.l.b16 %v28
    %v637 = vunpack.c.l.b16 %v29
    %v638 = vunpack.c.l.b16 %v30
    %v639 = vunpack.c.l.b16 %v31
    %v640 = vunpack.c.l.b16 %v32
    %v641 = vunpack.c.l.b16 %v33
    %v642 = vunpack.c.l.b16 %v34
    %v643 = vunpack.c.l.b16 %v35
    %v644 = vunpack.c.l.b16 %v36
    %v645 = vunpack.c.l.b16 %v37
    %v646 = vunpack.c.l.b16 %v38
    %v647 = vunpack.c.l.b16 %v39
    %v648 = vunpack.c.l.b16 %v40
    %v649 = vunpack.c.l.b16 %v41
    %v650 = vunpack.c.l.b16 %v42
    %v651 = vunpack.c.l.b16 %v43
    %v652 = vunpack.c.l.b16 %v44
    %v653 = vunpack.c.l.b16 %v45
    %v654 = vunpack.c.l.b16 %v46
    %v655 = vunpack.c.l.b16 %v47
    %v656 = vunpack.c.l.b16 %v48
    %v657 = vunpack.c.l.b16 %v49
    %v658 = vunpack.c.l.b16 %v50
    %v659 = vunpack.c.l.b16 %v51
    %v660 = vunpack.c.l.b16 %v52
    %v661 = vunpack.c.l.b16 %v53
    %v662 = vunpack.c.l.b16 %v54
    %v663 = vunpack.c.l.b16 %v55
    %v664 = vunpack.c.l.b16 %v56
    %v665 = vunpack.c.l.b16 %v57
    %v666 = vunpack.c.l.b16 %v58
    %v667 = vunpack.c.l.b16 %v59
    %v668 = vunpack.c.l.b16 %v60
    %v669 = vunpack.c.l.b16 %v61
    %v670 = vunpack.c.l.b16 %v62
    %v671 = vunpack.c.l.b16 %v63
    %v672 = vunpack.c.l.b16 %v64
    %v673 = vunpack.c.l.b16 %v65
    %v674 = vunpack.c.l.b16 %v66
    %v675 = vunpack.c.l.b16 %v67
    %v676 = vunpack.c.l.b16 %v68
    %v677 = vunpack.c.l.b16 %v69
    %v678 = vunpack.c.l.b16 %v70
    %v679 = vunpack.c.l.b16 %v71
    %v680 = vunpack.c.l.b16 %v72
    %v681 = vunpack.c.l.b16 %v73
    %v682 = vunpack.c.l.b16 %v74
    %v683 = vunpack.c.l.b16 %v75
    %v684 = vunpack.c.l.b16 %v76
    %v685 = vunpack.c.l.b16 %v77
    %v686 = vunpack.c.l.b16 %v78
    %v687 = vunpack.c.l.b16 %v79
    %v688 = vunpack.c.l.b16 %v80
    %v689 = vunpack.c.l.b16 %v81
    %v690 = vunpack.c.l.b16 %v82
    %v691 = vunpack.c.l.b16 %v83
    %v692 = vunpack.c.l.b16 %v84
    %v693 = vunpack.c.l.b16 %v85
    %v694 = vunpack.c.l.b16 %v86
    %v695 = vunpack.c.l.b16 %v87
    %v696 = vunpack.c.l.b16 %v88
    %v697 = vunpack.c.l.b16 %v89
    %v698 = vunpack.c.l.b16 %v90
    %v699 = vunpack.c.l.b16 %v91
    %v700 = vunpack.c.l.b16 %v92
    %v701 = vunpack.c.l.b16 %v93
    %v702 = vunpack.c.l.b16 %v94
    %v703 = vunpack.c.l.b16 %v95
    %v704 = vunpack.c.l.b16 %v96
    %v705 = vunpack.c.l.b16 %v97
    %v706 = vunpack.c.l.b16 %v98
    %v707 = vunpack.c.l.b16 %v99
    %v708 = vunpack.c.l.b16 %v100
    %v709 = vunpack.c.l.b16 %v101
    %v710 = vunpack.c.l.b16 %v102
    %v711 = vunpack.c.l.b16 %v103
    %v712 = vunpack.c.l.b16 %v104
    %v713 = vunpack.c.l.b16 %v105
    %v714 = vunpack.c.l.b16 %v106
    %v715 = vunpack.c.l.b16 %v107
    %v716 = vunpack.c.l.b16 %v108
    %v717 = vunpack.c.l.b16 %v109
    %v718 = vunpack.c.l.b16 %v110
    %v719 = vunpack.c.l.b16 %v111
    %v720 = vunpack.c.l.b16 %v112
    %v721 = vunpack.c.l.b16 %v113
    %v722 = vunpack.c.l.b16 %v114
    %v723 = vunpack.c.l.b16 %v115
    %v724 = vunpack.c.l.b16 %v116
    %v725 = vunpack.c.l.b16 %v117
    %v726 = vunpack.c.l.b16 %v118
    %v727 = vunpack.c.l.b16 %v119
    %v728 = vunpack.c.l.b16 %v120
    %v729 = vunpack.c.l.b16 %v121
    %v730 = vunpack.c.l.b16 %v122
    %v731 = vunpack.c.l.b16 %v123
    %v732 = vunpack.c.l.b16 %v124
    %v733 = vunpack.c.l.b16 %v125
    %v734 = vunpack.c.l.b16 %v126
    %v735 = vunpack.c.l.b16 %v127
    %v736 = vunpack.c.l.b16 %v128
    %v737 = vunpack.c.l.b16 %v129
    %v738 = vunpack.c.l.b16 %v130
    %v739 = vunpack.c.l.b16 %v131
    %v740 = vunpack.c.l.b16 %v132
    %v741 = vunpack.c.l.b16 %v133
    %v742 = vunpack.c.l.b16 %v134
    %v743 = vunpack.c.l.b16 %v135
    %v744 = vunpack.c.l.b16 %v136
    %v745 = vunpack.c.l.b16 %v137
    %v746 = vunpack.c.l.b16 %v138
    %v747 = vunpack.c.l.b16 %v139
    %v748 = vunpack.c.l.b16 %v140
    %v749 = vunpack.c.l.b16 %v141
    %v750 = vunpack.c.l.b16 %v142
    %v751 = vunpack.c.l.b16 %v143
    %v752 = vunpack.c.l.b16 %v144
    %v753 = vunpack.c.l.b16 %v145
    %v754 = vunpack.c.l.b16 %v146
    %v755 = vunpack.c.l.b16 %v147
    %v756 = vunpack.c.l.b16 %v148
    %v757 = vunpack.c.l.b16 %v149
    %v758 = vunpack.c.l.b16 %v150
    %v759 = vunpack.c.l.b16 %v151
    %v760 = vunpack.c.l.b16 %v152
    %v761 = vunpack.c.l.b16 %v153
    %v762 = vunpack.c.l.b16 %v154
    %v763 = vunpack.c.l.b16 %v155
    %v764 = vunpack.c.l.b16 %v156
    %v765 = vunpack.c.l.b16 %v157
    %v766 = vunpack.c.l.b16 %v158
    %v767 = vunpack.c.l.b16 %v159
    %v768 = vunpack.c.l.b16 %v160
    %v769 = vunpack.c.l.b16 %v161
    %v770 = vunpack.c.l.b16 %v162
    %v771 = vunpack.c.l.b16 %v163
    %v772 = vunpack.c.l.b16 %v164
    %v773 = vunpack.c.l.b16 %v165
    %v774 = vunpack.c.l.b16 %v166
    %v775 = vunpack.c.l.b16 %v167
    %v776 = vunpack.c.l.b16 %v168
    %v777 = vunpack.c.l.b16 %v169
    %v778 = vunpack.c.l.b16 %v170
    %v779 = vunpack.c.l.b16 %v171
    %v780 = vunpack.c.l.b16 %v172
    %v781 = vunpack.c.l.b16 %v173
    %v782 = vunpack.c.l.b16 %v174
    %v783 = vunpack.c.l.b16 %v175
    %v784 = vunpack.c.l.b16 %v176
    %v785 = vunpack.c.l.b16 %v177
    %v786 = vunpack.c.l.b16 %v178
    %v787 = vunpack.c.l.b16 %v179
    %v788 = vunpack.c.l.b16 %v180
    %v789 = vunpack.c.l.b16 %v181
    %v790 = vunpack.c.l.b16 %v182
    %v791 = vunpack.c.l.b16 %v183
    %v792 = vunpack.c.l.b16 %v184
    %v793 = vunpack.c.l.b16 %v185
    %v794 = vunpack.c.l.b16 %v186
    %v795 = vunpack.c.l.b16 %v187
    %v796 = vunpack.c.l.b16 %v188
    %v797 = vunpack.c.l.b16 %v189
    %v798 = vunpack.c.l.b16 %v190
    %v799 = vunpack.c.l.b16 %v191
    %v800 = vunpack.c.l.b16 %v192
    %v801 = vunpack.c.l.b16 %v193
    %v802 = vunpack.c.l.b16 %v194
    %v803 = vunpack.c.l.b16 %v195
    %v804 = vunpack.c.l.b16 %v196
    %v805 = vunpack.c.l.b16 %v197
    %v806 = vunpack.c.l.b16 %v198
    %v807 = vunpack.c.l.b16 %v199
    %v808 = vunpack.c.l.b16 %v200
    %v809 = vunpack.c.l.b16 %v201
    %v810 = vunpack.c.l.b16 %v202
    %v811 = vunpack.c.l.b16 %v203
    %v812 = vunpack.c.l.b16 %v204
    %v813 = vunpack.c.l.b16 %v205
    %v814 = vunpack.c.l.b16 %v206
    %v815 = vunpack.c.l.b16 %v207
    %v816 = vunpack.c.l.b16 %v208
    %v817 = vunpack.c.l.b16 %v209
    %v818 = vunpack.c.l.b16 %v210
    %v819 = vunpack.c.l.b16 %v211
    %v820 = vunpack.c.l.b16 %v212
    %v821 = vunpack.c.l.b16 %v213
    %v822 = vunpack.c.l.b16 %v214
    %v823 = vunpack.c.l.b16 %v215
    %v824 = vunpack.c.l.b16 %v216
    %v825 = vunpack.c.l.b16 %v217
    %v826 = vunpack.c.l.b16 %v218
    %v827 = vunpack.c.l.b16 %v219
    %v828 = vunpack.c.l.b16 %v220
    %v829 = vunpack.c.l.b16 %v221
    %v830 = vunpack.c.l.b16 %v222
    %v831 = vunpack.c.l.b16 %v223
    %v832 = vunpack.c.l.b16 %v224
    %v833 = vunpack.c.l.b16 %v225
    %v834 = vunpack.c.l.b16 %v226
    %v835 = vunpack.c.l.b16 %v227
    %v836 = vunpack.c.l.b16 %v228
    %v837 = vunpack.c.l.b16 %v229
    %v838 = vunpack.c.l.b16 %v230
    %v839 = vunpack.c.l.b16 %v231
    %v840 = vunpack.c.l.b16 %v232
    %v841 = vunpack.c.l.b16 %v233
    %v842 = vunpack.c.l.b16 %v234
    %v843 = vunpack.c.l.b16 %v235
    %v844 = vunpack.c.l.b16 %v236
    %v845 = vunpack.c.l.b16 %v237
    %v846 = vunpack.c.l.b16 %v238
    %v847 = vunpack.c.l.b16 %v239
    %v848 = vunpack.c.l.b16 %v240
    %v849 = vunpack.c.l.b16 %v241
    %v850 = vunpack.c.l.b16 %v242
    %v851 = vunpack.c.l.b16 %v243
    %v852 = vunpack.c.l.b16 %v244
    %v853 = vunpack.c.l.b16 %v245
    %v854 = vunpack.c.l.b16 %v246
    %v855 = vunpack.c.l.b16 %v247
    %v856 = vunpack.c.l.b16 %v248
    %v857 = vunpack.c.l.b16 %v249
    %v858 = vunpack.c.l.b16 %v250
    %v859 = vunpack.c.l.b16 %v251
    %v860 = vunpack.c.l.b16 %v252
    %v861 = vunpack.c.l.b16 %v253
    %v862 = vunpack.c.l.b16 %v254
    %v863 = vunpack.c.l.b16 %v255
    %v864 = vunpack.c.l.b16 %v256
    %v865 = vunpack.c.l.b16 %v257
    %v866 = vunpack.c.l.b16 %v258
    %v867 = vunpack.c.l.b16 %v259
    %v868 = vunpack.c.l.b16 %v260
    %v869 = vunpack.c.l.b16 %v261
    %v870 = vunpack.c.l.b16 %v262
    %v871 = vunpack.c.l.b16 %v263
    %v872 = vunpack.c.l.b16 %v264
    %v873 = vunpack.c.l.b16 %v265
    %v874 = vunpack.c.l.b16 %v266
    %v875 = vunpack.c.l.b16 %v267
    %v876 = vunpack.c.l.b16 %v268
    %v877 = vpack.c.b16 %v622, %v621
    %v878 = vpack.c.b16 %v624, %v623
    %v879 = vpack.c.b16 %v626, %v625
    %v880 = vpack.c.b16 %v628, %v627
    %v881 = vpack.c.b16 %v630, %v629
    %v882 = vpack.c.b16 %v632, %v631
    %v883 = vpack.c.b16 %v634, %v633
    %v884 = vpack.c.b16 %v636, %v635
    %v885 = vpack.c.b16 %v638, %v637
    %v886 = vpack.c.b16 %v640, %v639
    %v887 = vpack.c.b16 %v642, %v641
    %v888 = vpack.c.b16 %v644, %v643
    %v889 = vpack.c.b16 %v646, %v645
    %v890 = vpack.c.b16 %v648, %v647
    %v891 = vpack.c.b16 %v650, %v649
    %v892 = vpack.c.b16 %v652, %v651
    %v893 = vpack.c.b16 %v654, %v653
    %v894 = vpack.c.b16 %v656, %v655
    %v895 = vpack.c.b16 %v658, %v657
    %v896 = vpack.c.b16 %v660, %v659
    %v897 = vpack.c.b16 %v662, %v661
    %v898 = vpack.c.b16 %v664, %v663
    %v899 = vpack.c.b16 %v666, %v665
    %v900 = vpack.c.b16 %v668, %v667
    %v901 = vpack.c.b16 %v670, %v669
    %v902 = vpack.c.b16 %v672, %v671
    %v903 = vpack.c.b16 %v674, %v673
    %v904 = vpack.c.b16 %v676, %v675
    %v905 = vpack.c.b16 %v678, %v677
    %v906 = vpack.c.b16 %v680, %v679
    %v907 = vpack.c.b16 %v682, %v681
    %v908 = vpack.c.b16 %v684, %v683
    %v909 = vpack.c.b16 %v686, %v685
    %v910 = vpack.c.b16 %v688, %v687
    %v911 = vpack.c.b16 %v690, %v689
    %v912 = vpack.c.b16 %v692, %v691
    %v913 = vpack.c.b16 %v694, %v693
    %v914 = vpack.c.b16 %v696, %v695
    %v915 = vpack.c.b16 %v698, %v697
    %v916 = vpack.c.b16 %v700, %v699
    %v917 = vpack.c.b16 %v702, %v701
    %v918 = vpack.c.b16 %v704, %v703
    %v919 = vpack.c.b16 %v706, %v705
    %v920 = vpack.c.b16 %v708, %v707
    %v921 = vpack.c.b16 %v710, %v709
    %v922 = vpack.c.b16 %v712, %v711
    %v923 = vpack.c.b16 %v714, %v713
    %v924 = vpack.c.b16 %v716, %v715
    %v925 = vpack.c.b16 %v718, %v717
    %v926 = vpack.c.b16 %v720, %v719
    %v927 = vpack.c.b16 %v722, %v721
    %v928 = vpack.c.b16 %v724, %v723
    %v929 = vpack.c.b16 %v726, %v725
    %v930 = vpack.c.b16 %v728, %v727
    %v931 = vpack.c.b16 %v730, %v729
    %v932 = vpack.c.b16 %v732, %v731
    %v933 = vpack.c.b16 %v734, %v733
    %v934 = vpack.c.b16 %v736, %v735
    %v935 = vpack.c.b16 %v738, %v737
    %v936 = vpack.c.b16 %v740, %v739
    %v937 = vpack.c.b16 %v742, %v741
    %v938 = vpack.c.b16 %v744, %v743
    %v939 = vpack.c.b16 %v746, %v745
    %v940 = vpack.c.b16 %v748, %v747
    %v941 = vpack.c.b16 %v750, %v749
    %v942 = vpack.c.b16 %v752, %v751
    %v943 = vpack.c.b16 %v754, %v753
    %v944 = vpack.c.b16 %v756, %v755
    %v945 = vpack.c.b16 %v758, %v757
    %v946 = vpack.c.b16 %v760, %v759
    %v947 = vpack.c.b16 %v762, %v761
    %v948 = vpack.c.b16 %v764, %v763
    %v949 = vpack.c.b16 %v766, %v765
    %v950 = vpack.c.b16 %v768, %v767
    %v951 = vpack.c.b16 %v770, %v769
    %v952 = vpack.c.b16 %v772, %v771
    %v953 = vpack.c.b16 %v774, %v773
    %v954 = vpack.c.b16 %v776, %v775
    %v955 = vpack.c.b16 %v778, %v777
    %v956 = vpack.c.b16 %v780, %v779
    %v957 = vpack.c.b16 %v782, %v781
    %v958 = vpack.c.b16 %v784, %v783
    %v959 = vpack.c.b16 %v786, %v785
    %v960 = vpack.c.b16 %v788, %v787
    %v961 = vpack.c.b16 %v790, %v789
    %v962 = vpack.c.b16 %v792, %v791
    %v963 = vpack.c.b16 %v794, %v793
    %v964 = vpack.c.b16 %v796, %v795
    %v965 = vpack.c.b16 %v798, %v797
    %v966 = vpack.c.b16 %v800, %v799
    %v967 = vpack.c.b16 %v802, %v801
    %v968 = vpack.c.b16 %v804, %v803
    %v969 = vpack.c.b16 %v806, %v805
    %v970 = vpack.c.b16 %v808, %v807
    %v971 = vpack.c.b16 %v810, %v809
    %v972 = vpack.c.b16 %v812, %v811
    %v973 = vpack.c.b16 %v814, %v813
    %v974 = vpack.c.b16 %v816, %v815
    %v975 = vpack.c.b16 %v818, %v817
    %v976 = vpack.c.b16 %v820, %v819
    %v977 = vpack.c.b16 %v822, %v821
    %v978 = vpack.c.b16 %v824, %v823
    %v979 = vpack.c.b16 %v826, %v825
    %v980 = vpack.c.b16 %v828, %v827
    %v981 = vpack.c.b16 %v830, %v829
    %v982 = vpack.c.b16 %v832, %v831
    %v983 = vpack.c.b16 %v834, %v833
    %v984 = vpack.c.b16 %v836, %v835
    %v985 = vpack.c.b16 %v838, %v837
    %v986 = vpack.c.b16 %v840, %v839
    %v987 = vpack.c.b16 %v842, %v841
    %v988 = vpack.c.b16 %v844, %v843
    %v989 = vpack.c.b16 %v846, %v845
    %v990 = vpack.c.b16 %v848, %v847
    %v991 = vpack.c.b16 %v850, %v849
    %v992 = vpack.c.b16 %v852, %v851
    %v993 = vpack.c.b16 %v854, %v853
    %v994 = vpack.c.b16 %v856, %v855
    %v995 = vpack.c.b16 %v858, %v857
    %v996 = vpack.c.b16 %v860, %v859
    %v997 = vpack.c.b16 %v862, %v861
    %v998 = vpack.c.b16 %v864, %v863
    %v999 = vpack.c.b16 %v866, %v865
    %v1000 = vpack.c.b16 %v868, %v867
    %v1001 = vpack.c.b16 %v870, %v869
    %v1002 = vpack.c.b16 %v872, %v871
    %v1003 = vpack.c.b16 %v874, %v873
    %v1004 = vpack.c.b16 %v876, %v875
    %1133 = vmatprep.subr.bf16.mxu0 0
    %1134 = vmatpush1.bf16.msra.mxu0 %v877
    %1135 = vmatprep.subr.bf16.mxu0 0
    %1136 = vmatpush1.bf16.msra.mxu0 %v878
    %1137 = vmatprep.subr.bf16.mxu0 0
    %1138 = vmatpush1.bf16.msra.mxu0 %v879
    %1139 = vmatprep.subr.bf16.mxu0 0
    %1140 = vmatpush1.bf16.msra.mxu0 %v880
    %1141 = vmatprep.subr.bf16.mxu0 0
    %1142 = vmatpush1.bf16.msra.mxu0 %v881
    %1143 = vmatprep.subr.bf16.mxu0 0
    %1144 = vmatpush1.bf16.msra.mxu0 %v882
    %1145 = vmatprep.subr.bf16.mxu0 0
    %1146 = vmatpush1.bf16.msra.mxu0 %v883
    %1147 = vmatprep.subr.bf16.mxu0 0
    %1148 = vmatpush1.bf16.msra.mxu0 %v884
    %1149 = vmatprep.subr.bf16.mxu0 0
    %1150 = vmatpush1.bf16.msra.mxu0 %v885
    %1151 = vmatprep.subr.bf16.mxu0 0
    %1152 = vmatpush1.bf16.msra.mxu0 %v886
    %1153 = vmatprep.subr.bf16.mxu0 0
    %1154 = vmatpush1.bf16.msra.mxu0 %v887
    %1155 = vmatprep.subr.bf16.mxu0 0
    %1156 = vmatpush1.bf16.msra.mxu0 %v888
    %1157 = vmatprep.subr.bf16.mxu0 0
    %1158 = vmatpush1.bf16.msra.mxu0 %v889
    %1159 = vmatprep.subr.bf16.mxu0 0
    %1160 = vmatpush1.bf16.msra.mxu0 %v890
    %1161 = vmatprep.subr.bf16.mxu0 0
    %1162 = vmatpush1.bf16.msra.mxu0 %v891
    %1163 = vmatprep.subr.bf16.mxu0 0
    %1164 = vmatpush1.bf16.msra.mxu0 %v892
    %1165 = vmatprep.mubr.bf16.mxu0 %v334
    %1166 = vmatmul.mubr.bf16.gmra.mrb[0].mxu0 %v333
    %v1167 = vpop.f32.mrb[0].mxu0
    %v1168 = vadd.f32 0.0, %v1167
    %v1169 = vpop.f32.mrb[0].mxu0
    %v1170 = vpop.f32.mrb[0].mxu0
    %v1171 = vadd.f32 0.0, %v1170
    %v1172 = vpop.f32.mrb[0].mxu0
    %1173 = vdwg.mxu0
    %1174 = vmatprep.subr.bf16.mxu0 0
    %1175 = vmatpush1.bf16.msra.mxu0 %v893
    %1176 = vmatprep.subr.bf16.mxu0 0
    %1177 = vmatpush1.bf16.msra.mxu0 %v894
    %1178 = vmatprep.subr.bf16.mxu0 0
    %1179 = vmatpush1.bf16.msra.mxu0 %v895
    %1180 = vmatprep.subr.bf16.mxu0 0
    %1181 = vmatpush1.bf16.msra.mxu0 %v896
    %1182 = vmatprep.subr.bf16.mxu0 0
    %1183 = vmatpush1.bf16.msra.mxu0 %v897
    %1184 = vmatprep.subr.bf16.mxu0 0
    %1185 = vmatpush1.bf16.msra.mxu0 %v898
    %1186 = vmatprep.subr.bf16.mxu0 0
    %1187 = vmatpush1.bf16.msra.mxu0 %v899
    %1188 = vmatprep.subr.bf16.mxu0 0
    %1189 = vmatpush1.bf16.msra.mxu0 %v900
    %1190 = vmatprep.subr.bf16.mxu0 0
    %1191 = vmatpush1.bf16.msra.mxu0 %v901
    %1192 = vmatprep.subr.bf16.mxu0 0
    %1193 = vmatpush1.bf16.msra.mxu0 %v902
    %1194 = vmatprep.subr.bf16.mxu0 0
    %1195 = vmatpush1.bf16.msra.mxu0 %v903
    %1196 = vmatprep.subr.bf16.mxu0 0
    %1197 = vmatpush1.bf16.msra.mxu0 %v904
    %1198 = vmatprep.subr.bf16.mxu0 0
    %1199 = vmatpush1.bf16.msra.mxu0 %v905
    %1200 = vmatprep.subr.bf16.mxu0 0
    %1201 = vmatpush1.bf16.msra.mxu0 %v906
    %1202 = vmatprep.subr.bf16.mxu0 0
    %1203 = vmatpush1.bf16.msra.mxu0 %v907
    %1204 = vmatprep.subr.bf16.mxu0 0
    %1205 = vmatpush1.bf16.msra.mxu0 %v908
    %1206 = vmatprep.mubr.bf16.mxu0 %v336
    %1207 = vmatmul.mubr.bf16.gmra.mrb[0].mxu0 %v335
    %v1208 = vpop.f32.mrb[0].mxu0
    %v1209 = vadd.f32 %v1168, %v1208
    %v1210 = vpop.f32.mrb[0].mxu0
    %v1211 = vpop.f32.mrb[0].mxu0
    %v1212 = vadd.f32 %v1171, %v1211
    %v1213 = vpop.f32.mrb[0].mxu0
    %1214 = vdwg.mxu0
    %1215 = vmatprep.subr.bf16.mxu0 0
    %1216 = vmatpush1.bf16.msra.mxu0 %v909
    %1217 = vmatprep.subr.bf16.mxu0 0
    %1218 = vmatpush1.bf16.msra.mxu0 %v910
    %1219 = vmatprep.subr.bf16.mxu0 0
    %1220 = vmatpush1.bf16.msra.mxu0 %v911
    %1221 = vmatprep.subr.bf16.mxu0 0
    %1222 = vmatpush1.bf16.msra.mxu0 %v912
    %1223 = vmatprep.subr.bf16.mxu0 0
    %1224 = vmatpush1.bf16.msra.mxu0 %v913
    %1225 = vmatprep.subr.bf16.mxu0 0
    %1226 = vmatpush1.bf16.msra.mxu0 %v914
    %1227 = vmatprep.subr.bf16.mxu0 0
    %1228 = vmatpush1.bf16.msra.mxu0 %v915
    %1229 = vmatprep.subr.bf16.mxu0 0
    %1230 = vmatpush1.bf16.msra.mxu0 %v916
    %1231 = vmatprep.subr.bf16.mxu0 0
    %1232 = vmatpush1.bf16.msra.mxu0 %v917
    %1233 = vmatprep.subr.bf16.mxu0 0
    %1234 = vmatpush1.bf16.msra.mxu0 %v918
    %1235 = vmatprep.subr.bf16.mxu0 0
    %1236 = vmatpush1.bf16.msra.mxu0 %v919
    %1237 = vmatprep.subr.bf16.mxu0 0
    %1238 = vmatpush1.bf16.msra.mxu0 %v920
    %1239 = vmatprep.subr.bf16.mxu0 0
    %1240 = vmatpush1.bf16.msra.mxu0 %v921
    %1241 = vmatprep.subr.bf16.mxu0 0
    %1242 = vmatpush1.bf16.msra.mxu0 %v922
    %1243 = vmatprep.subr.bf16.mxu0 0
    %1244 = vmatpush1.bf16.msra.mxu0 %v923
    %1245 = vmatprep.subr.bf16.mxu0 0
    %1246 = vmatpush1.bf16.msra.mxu0 %v924
    %1247 = vmatprep.mubr.bf16.mxu0 %v338
    %1248 = vmatmul.mubr.bf16.gmra.mrb[0].mxu0 %v337
    %v1249 = vpop.f32.mrb[0].mxu0
    %v1250 = vadd.f32 %v1209, %v1249
    %v1251 = vpop.f32.mrb[0].mxu0
    %v1252 = vpop.f32.mrb[0].mxu0
    %v1253 = vadd.f32 %v1212, %v1252
    %v1254 = vpop.f32.mrb[0].mxu0
    %1255 = vdwg.mxu0
    %1256 = vmatprep.subr.bf16.mxu0 0
    %1257 = vmatpush1.bf16.msra.mxu0 %v925
    %1258 = vmatprep.subr.bf16.mxu0 0
    %1259 = vmatpush1.bf16.msra.mxu0 %v926
    %1260 = vmatprep.subr.bf16.mxu0 0
    %1261 = vmatpush1.bf16.msra.mxu0 %v927
    %1262 = vmatprep.subr.bf16.mxu0 0
    %1263 = vmatpush1.bf16.msra.mxu0 %v928
    %1264 = vmatprep.subr.bf16.mxu0 0
    %1265 = vmatpush1.bf16.msra.mxu0 %v929
    %1266 = vmatprep.subr.bf16.mxu0 0
    %1267 = vmatpush1.bf16.msra.mxu0 %v930
    %1268 = vmatprep.subr.bf16.mxu0 0
    %1269 = vmatpush1.bf16.msra.mxu0 %v931
    %1270 = vmatprep.subr.bf16.mxu0 0
    %1271 = vmatpush1.bf16.msra.mxu0 %v932
    %1272 = vmatprep.subr.bf16.mxu0 0
    %1273 = vmatpush1.bf16.msra.mxu0 %v933
    %1274 = vmatprep.subr.bf16.mxu0 0
    %1275 = vmatpush1.bf16.msra.mxu0 %v934
    %1276 = vmatprep.subr.bf16.mxu0 0
    %1277 = vmatpush1.bf16.msra.mxu0 %v935
    %1278 = vmatprep.subr.bf16.mxu0 0
    %1279 = vmatpush1.bf16.msra.mxu0 %v936
    %1280 = vmatprep.subr.bf16.mxu0 0
    %1281 = vmatpush1.bf16.msra.mxu0 %v937
    %1282 = vmatprep.subr.bf16.mxu0 0
    %1283 = vmatpush1.bf16.msra.mxu0 %v938
    %1284 = vmatprep.subr.bf16.mxu0 0
    %1285 = vmatpush1.bf16.msra.mxu0 %v939
    %1286 = vmatprep.subr.bf16.mxu0 0
    %1287 = vmatpush1.bf16.msra.mxu0 %v940
    %1288 = vmatprep.mubr.bf16.mxu0 %v340
    %1289 = vmatmul.mubr.bf16.gmra.mrb[0].mxu0 %v339
    %v1290 = vpop.f32.mrb[0].mxu0
    %v1291 = vadd.f32 %v1250, %v1290
    %v1292 = vpop.f32.mrb[0].mxu0
    %v1293 = vpop.f32.mrb[0].mxu0
    %v1294 = vadd.f32 %v1253, %v1293
    %v1295 = vpop.f32.mrb[0].mxu0
    %1296 = vdwg.mxu0
    %1297 = vmatprep.subr.bf16.mxu0 0
    %1298 = vmatpush1.bf16.msra.mxu0 %v941
    %1299 = vmatprep.subr.bf16.mxu0 0
    %1300 = vmatpush1.bf16.msra.mxu0 %v942
    %1301 = vmatprep.subr.bf16.mxu0 0
    %1302 = vmatpush1.bf16.msra.mxu0 %v943
    %1303 = vmatprep.subr.bf16.mxu0 0
    %1304 = vmatpush1.bf16.msra.mxu0 %v944
    %1305 = vmatprep.subr.bf16.mxu0 0
    %1306 = vmatpush1.bf16.msra.mxu0 %v945
    %1307 = vmatprep.subr.bf16.mxu0 0
    %1308 = vmatpush1.bf16.msra.mxu0 %v946
    %1309 = vmatprep.subr.bf16.mxu0 0
    %1310 = vmatpush1.bf16.msra.mxu0 %v947
    %1311 = vmatprep.subr.bf16.mxu0 0
    %1312 = vmatpush1.bf16.msra.mxu0 %v948
    %1313 = vmatprep.subr.bf16.mxu0 0
    %1314 = vmatpush1.bf16.msra.mxu0 %v949
    %1315 = vmatprep.subr.bf16.mxu0 0
    %1316 = vmatpush1.bf16.msra.mxu0 %v950
    %1317 = vmatprep.subr.bf16.mxu0 0
    %1318 = vmatpush1.bf16.msra.mxu0 %v951
    %1319 = vmatprep.subr.bf16.mxu0 0
    %1320 = vmatpush1.bf16.msra.mxu0 %v952
    %1321 = vmatprep.subr.bf16.mxu0 0
    %1322 = vmatpush1.bf16.msra.mxu0 %v953
    %1323 = vmatprep.subr.bf16.mxu0 0
    %1324 = vmatpush1.bf16.msra.mxu0 %v954
    %1325 = vmatprep.subr.bf16.mxu0 0
    %1326 = vmatpush1.bf16.msra.mxu0 %v955
    %1327 = vmatprep.subr.bf16.mxu0 0
    %1328 = vmatpush1.bf16.msra.mxu0 %v956
    %1329 = vmatprep.mubr.bf16.mxu0 %v342
    %1330 = vmatmul.mubr.bf16.gmra.mrb[0].mxu0 %v341
    %v1331 = vpop.f32.mrb[0].mxu0
    %v1332 = vadd.f32 %v1291, %v1331
    %v1333 = vpop.f32.mrb[0].mxu0
    %v1334 = vpop.f32.mrb[0].mxu0
    %v1335 = vadd.f32 %v1294, %v1334
    %v1336 = vpop.f32.mrb[0].mxu0
    %1337 = vdwg.mxu0
    %1338 = vmatprep.subr.bf16.mxu0 0
    %1339 = vmatpush1.bf16.msra.mxu0 %v957
    %1340 = vmatprep.subr.bf16.mxu0 0
    %1341 = vmatpush1.bf16.msra.mxu0 %v958
    %1342 = vmatprep.subr.bf16.mxu0 0
    %1343 = vmatpush1.bf16.msra.mxu0 %v959
    %1344 = vmatprep.subr.bf16.mxu0 0
    %1345 = vmatpush1.bf16.msra.mxu0 %v960
    %1346 = vmatprep.subr.bf16.mxu0 0
    %1347 = vmatpush1.bf16.msra.mxu0 %v961
    %1348 = vmatprep.subr.bf16.mxu0 0
    %1349 = vmatpush1.bf16.msra.mxu0 %v962
    %1350 = vmatprep.subr.bf16.mxu0 0
    %1351 = vmatpush1.bf16.msra.mxu0 %v963
    %1352 = vmatprep.subr.bf16.mxu0 0
    %1353 = vmatpush1.bf16.msra.mxu0 %v964
    %1354 = vmatprep.subr.bf16.mxu0 0
    %1355 = vmatpush1.bf16.msra.mxu0 %v965
    %1356 = vmatprep.subr.bf16.mxu0 0
    %1357 = vmatpush1.bf16.msra.mxu0 %v966
    %1358 = vmatprep.subr.bf16.mxu0 0
    %1359 = vmatpush1.bf16.msra.mxu0 %v967
    %1360 = vmatprep.subr.bf16.mxu0 0
    %1361 = vmatpush1.bf16.msra.mxu0 %v968
    %1362 = vmatprep.subr.bf16.mxu0 0
    %1363 = vmatpush1.bf16.msra.mxu0 %v969
    %1364 = vmatprep.subr.bf16.mxu0 0
    %1365 = vmatpush1.bf16.msra.mxu0 %v970
    %1366 = vmatprep.subr.bf16.mxu0 0
    %1367 = vmatpush1.bf16.msra.mxu0 %v971
    %1368 = vmatprep.subr.bf16.mxu0 0
    %1369 = vmatpush1.bf16.msra.mxu0 %v972
    %1370 = vmatprep.mubr.bf16.mxu0 %v344
    %1371 = vmatmul.mubr.bf16.gmra.mrb[0].mxu0 %v343
    %v1372 = vpop.f32.mrb[0].mxu0
    %v1373 = vadd.f32 %v1332, %v1372
    %v1374 = vpop.f32.mrb[0].mxu0
    %v1375 = vpop.f32.mrb[0].mxu0
    %v1376 = vadd.f32 %v1335, %v1375
    %v1377 = vpop.f32.mrb[0].mxu0
    %1378 = vdwg.mxu0
    %1379 = vmatprep.subr.bf16.mxu0 0
    %1380 = vmatpush1.bf16.msra.mxu0 %v973
    %1381 = vmatprep.subr.bf16.mxu0 0
    %1382 = vmatpush1.bf16.msra.mxu0 %v974
    %1383 = vmatprep.subr.bf16.mxu0 0
    %1384 = vmatpush1.bf16.msra.mxu0 %v975
    %1385 = vmatprep.subr.bf16.mxu0 0
    %1386 = vmatpush1.bf16.msra.mxu0 %v976
    %1387 = vmatprep.subr.bf16.mxu0 0
    %1388 = vmatpush1.bf16.msra.mxu0 %v977
    %1389 = vmatprep.subr.bf16.mxu0 0
    %1390 = vmatpush1.bf16.msra.mxu0 %v978
    %1391 = vmatprep.subr.bf16.mxu0 0
    %1392 = vmatpush1.bf16.msra.mxu0 %v979
    %1393 = vmatprep.subr.bf16.mxu0 0
    %1394 = vmatpush1.bf16.msra.mxu0 %v980
    %1395 = vmatprep.subr.bf16.mxu0 0
    %1396 = vmatpush1.bf16.msra.mxu0 %v981
    %1397 = vmatprep.subr.bf16.mxu0 0
    %1398 = vmatpush1.bf16.msra.mxu0 %v982
    %1399 = vmatprep.subr.bf16.mxu0 0
    %1400 = vmatpush1.bf16.msra.mxu0 %v983
    %1401 = vmatprep.subr.bf16.mxu0 0
    %1402 = vmatpush1.bf16.msra.mxu0 %v984
    %1403 = vmatprep.subr.bf16.mxu0 0
    %1404 = vmatpush1.bf16.msra.mxu0 %v985
    %1405 = vmatprep.subr.bf16.mxu0 0
    %1406 = vmatpush1.bf16.msra.mxu0 %v986
    %1407 = vmatprep.subr.bf16.mxu0 0
    %1408 = vmatpush1.bf16.msra.mxu0 %v987
    %1409 = vmatprep.subr.bf16.mxu0 0
    %1410 = vmatpush1.bf16.msra.mxu0 %v988
    %1411 = vmatprep.mubr.bf16.mxu0 %v346
    %1412 = vmatmul.mubr.bf16.gmra.mrb[0].mxu0 %v345
    %v1413 = vpop.f32.mrb[0].mxu0
    %v1414 = vadd.f32 %v1373, %v1413
    %v1415 = vpop.f32.mrb[0].mxu0
    %v1416 = vpop.f32.mrb[0].mxu0
    %v1417 = vadd.f32 %v1376, %v1416
    %v1418 = vpop.f32.mrb[0].mxu0
    %1419 = vdwg.mxu0
    %1420 = vmatprep.subr.bf16.mxu0 0
    %1421 = vmatpush1.bf16.msra.mxu0 %v989
    %1422 = vmatprep.subr.bf16.mxu0 0
    %1423 = vmatpush1.bf16.msra.mxu0 %v990
    %1424 = vmatprep.subr.bf16.mxu0 0
    %1425 = vmatpush1.bf16.msra.mxu0 %v991
    %1426 = vmatprep.subr.bf16.mxu0 0
    %1427 = vmatpush1.bf16.msra.mxu0 %v992
    %1428 = vmatprep.subr.bf16.mxu0 0
    %1429 = vmatpush1.bf16.msra.mxu0 %v993
    %1430 = vmatprep.subr.bf16.mxu0 0
    %1431 = vmatpush1.bf16.msra.mxu0 %v994
    %1432 = vmatprep.subr.bf16.mxu0 0
    %1433 = vmatpush1.bf16.msra.mxu0 %v995
    %1434 = vmatprep.subr.bf16.mxu0 0
    %1435 = vmatpush1.bf16.msra.mxu0 %v996
    %1436 = vmatprep.subr.bf16.mxu0 0
    %1437 = vmatpush1.bf16.msra.mxu0 %v997
    %1438 = vmatprep.subr.bf16.mxu0 0
    %1439 = vmatpush1.bf16.msra.mxu0 %v998
    %1440 = vmatprep.subr.bf16.mxu0 0
    %1441 = vmatpush1.bf16.msra.mxu0 %v999
    %1442 = vmatprep.subr.bf16.mxu0 0
    %1443 = vmatpush1.bf16.msra.mxu0 %v1000
    %1444 = vmatprep.subr.bf16.mxu0 0
    %1445 = vmatpush1.bf16.msra.mxu0 %v1001
    %1446 = vmatprep.subr.bf16.mxu0 0
    %1447 = vmatpush1.bf16.msra.mxu0 %v1002
    %1448 = vmatprep.subr.bf16.mxu0 0
    %1449 = vmatpush1.bf16.msra.mxu0 %v1003
    %1450 = vmatprep.subr.bf16.mxu0 0
    %1451 = vmatpush1.bf16.msra.mxu0 %v1004
    %1452 = vmatprep.mubr.bf16.mxu0 %v348
    %1453 = vmatmul.mubr.bf16.gmra.mrb[0].mxu0 %v347
    %v1454 = vpop.f32.mrb[0].mxu0
    %v1455 = vadd.f32 %v1414, %v1454
    %v1456 = vpop.f32.mrb[0].mxu0
    %v1457 = vpop.f32.mrb[0].mxu0
    %v1458 = vadd.f32 %v1417, %v1457
    %v1459 = vpop.f32.mrb[0].mxu0
    %1460 = vdwg.mxu0
    %s1461 = scalar_lea.vmem %s0, 128
    %v1462 = vld [vmem:[%s1461] sm:$0xff]
    %v1463 = vld [vmem:[%s1461 + $0x8] sm:$0xff]
    %v1464 = vld [vmem:[%s1461 + $0x10] sm:$0xff]
    %v1465 = vld [vmem:[%s1461 + $0x18] sm:$0xff]
    %v1466 = vld [vmem:[%s1461 + $0x20] sm:$0xff]
    %v1467 = vld [vmem:[%s1461 + $0x28] sm:$0xff]
    %v1468 = vld [vmem:[%s1461 + $0x30] sm:$0xff]
    %v1469 = vld [vmem:[%s1461 + $0x38] sm:$0xff]
    %v1470 = vld [vmem:[%s1461 + $0x40] sm:$0xff]
    %v1471 = vld [vmem:[%s1461 + $0x48] sm:$0xff]
    %v1472 = vld [vmem:[%s1461 + $0x50] sm:$0xff]
    %v1473 = vld [vmem:[%s1461 + $0x58] sm:$0xff]
    %v1474 = vld [vmem:[%s1461 + $0x60] sm:$0xff]
    %v1475 = vld [vmem:[%s1461 + $0x68] sm:$0xff]
    %v1476 = vld [vmem:[%s1461 + $0x70] sm:$0xff]
    %v1477 = vld [vmem:[%s1461 + $0x78] sm:$0xff]
    %v1494 = vunpack.c.l.b16 %v1462
    %v1495 = vunpack.c.h.b16 %v1462
    %v1496 = vunpack.c.l.b16 %v1463
    %v1497 = vunpack.c.h.b16 %v1463
    %v1498 = vunpack.c.l.b16 %v1464
    %v1499 = vunpack.c.h.b16 %v1464
    %v1500 = vunpack.c.l.b16 %v1465
    %v1501 = vunpack.c.h.b16 %v1465
    %v1502 = vunpack.c.l.b16 %v1466
    %v1503 = vunpack.c.h.b16 %v1466
    %v1504 = vunpack.c.l.b16 %v1467
    %v1505 = vunpack.c.h.b16 %v1467
    %v1506 = vunpack.c.l.b16 %v1468
    %v1507 = vunpack.c.h.b16 %v1468
    %v1508 = vunpack.c.l.b16 %v1469
    %v1509 = vunpack.c.h.b16 %v1469
    %v1510 = vunpack.c.l.b16 %v1470
    %v1511 = vunpack.c.h.b16 %v1470
    %v1512 = vunpack.c.l.b16 %v1471
    %v1513 = vunpack.c.h.b16 %v1471
    %v1514 = vunpack.c.l.b16 %v1472
    %v1515 = vunpack.c.h.b16 %v1472
    %v1516 = vunpack.c.l.b16 %v1473
    %v1517 = vunpack.c.h.b16 %v1473
    %v1518 = vunpack.c.l.b16 %v1474
    %v1519 = vunpack.c.h.b16 %v1474
    %v1520 = vunpack.c.l.b16 %v1475
    %v1521 = vunpack.c.h.b16 %v1475
    %v1522 = vunpack.c.l.b16 %v1476
    %v1523 = vunpack.c.h.b16 %v1476
    %v1524 = vunpack.c.l.b16 %v1477
    %v1525 = vunpack.c.h.b16 %v1477
    %v1526 = vpack.c.b16 %v1510, %v1494
    %v1527 = vpack.c.b16 %v1511, %v1495
    %v1528 = vpack.c.b16 %v1512, %v1496
    %v1529 = vpack.c.b16 %v1513, %v1497
    %v1530 = vpack.c.b16 %v1514, %v1498
    %v1531 = vpack.c.b16 %v1515, %v1499
    %v1532 = vpack.c.b16 %v1516, %v1500
    %v1533 = vpack.c.b16 %v1517, %v1501
    %v1534 = vpack.c.b16 %v1518, %v1502
    %v1535 = vpack.c.b16 %v1519, %v1503
    %v1536 = vpack.c.b16 %v1520, %v1504
    %v1537 = vpack.c.b16 %v1521, %v1505
    %v1538 = vpack.c.b16 %v1522, %v1506
    %v1539 = vpack.c.b16 %v1523, %v1507
    %v1540 = vpack.c.b16 %v1524, %v1508
    %v1541 = vpack.c.b16 %v1525, %v1509
    %1558 = vmatprep.subr.bf16.mxu0 0
    %1559 = vmatpush1.bf16.msra.mxu0 %v877
    %1560 = vmatprep.subr.bf16.mxu0 0
    %1561 = vmatpush1.bf16.msra.mxu0 %v878
    %1562 = vmatprep.subr.bf16.mxu0 0
    %1563 = vmatpush1.bf16.msra.mxu0 %v879
    %1564 = vmatprep.subr.bf16.mxu0 0
    %1565 = vmatpush1.bf16.msra.mxu0 %v880
    %1566 = vmatprep.subr.bf16.mxu0 0
    %1567 = vmatpush1.bf16.msra.mxu0 %v881
    %1568 = vmatprep.subr.bf16.mxu0 0
    %1569 = vmatpush1.bf16.msra.mxu0 %v882
    %1570 = vmatprep.subr.bf16.mxu0 0
    %1571 = vmatpush1.bf16.msra.mxu0 %v883
    %1572 = vmatprep.subr.bf16.mxu0 0
    %1573 = vmatpush1.bf16.msra.mxu0 %v884
    %1574 = vmatprep.subr.bf16.mxu0 0
    %1575 = vmatpush1.bf16.msra.mxu0 %v885
    %1576 = vmatprep.subr.bf16.mxu0 0
    %1577 = vmatpush1.bf16.msra.mxu0 %v886
    %1578 = vmatprep.subr.bf16.mxu0 0
    %1579 = vmatpush1.bf16.msra.mxu0 %v887
    %1580 = vmatprep.subr.bf16.mxu0 0
    %1581 = vmatpush1.bf16.msra.mxu0 %v888
    %1582 = vmatprep.subr.bf16.mxu0 0
    %1583 = vmatpush1.bf16.msra.mxu0 %v889
    %1584 = vmatprep.subr.bf16.mxu0 0
    %1585 = vmatpush1.bf16.msra.mxu0 %v890
    %1586 = vmatprep.subr.bf16.mxu0 0
    %1587 = vmatpush1.bf16.msra.mxu0 %v891
    %1588 = vmatprep.subr.bf16.mxu0 0
    %1589 = vmatpush1.bf16.msra.mxu0 %v892
    %1590 = vmatprep.mubr.bf16.mxu0 %v1527
    %1591 = vmatmul.mubr.bf16.gmra.mrb[0].mxu0 %v1526
    %v1592 = vpop.f32.mrb[0].mxu0
    %v1593 = vadd.f32 0.0, %v1592
    %v1594 = vpop.f32.mrb[0].mxu0
    %v1595 = vpop.f32.mrb[0].mxu0
    %v1596 = vadd.f32 0.0, %v1595
    %v1597 = vpop.f32.mrb[0].mxu0
    %1598 = vdwg.mxu0
    %1599 = vmatprep.subr.bf16.mxu0 0
    %1600 = vmatpush1.bf16.msra.mxu0 %v893
    %1601 = vmatprep.subr.bf16.mxu0 0
    %1602 = vmatpush1.bf16.msra.mxu0 %v894
    %1603 = vmatprep.subr.bf16.mxu0 0
    %1604 = vmatpush1.bf16.msra.mxu0 %v895
    %1605 = vmatprep.subr.bf16.mxu0 0
    %1606 = vmatpush1.bf16.msra.mxu0 %v896
    %1607 = vmatprep.subr.bf16.mxu0 0
    %1608 = vmatpush1.bf16.msra.mxu0 %v897
    %1609 = vmatprep.subr.bf16.mxu0 0
    %1610 = vmatpush1.bf16.msra.mxu0 %v898
    %1611 = vmatprep.subr.bf16.mxu0 0
    %1612 = vmatpush1.bf16.msra.mxu0 %v899
    %1613 = vmatprep.subr.bf16.mxu0 0
    %1614 = vmatpush1.bf16.msra.mxu0 %v900
    %1615 = vmatprep.subr.bf16.mxu0 0
    %1616 = vmatpush1.bf16.msra.mxu0 %v901
    %1617 = vmatprep.subr.bf16.mxu0 0
    %1618 = vmatpush1.bf16.msra.mxu0 %v902
    %1619 = vmatprep.subr.bf16.mxu0 0
    %1620 = vmatpush1.bf16.msra.mxu0 %v903
    %1621 = vmatprep.subr.bf16.mxu0 0
    %1622 = vmatpush1.bf16.msra.mxu0 %v904
    %1623 = vmatprep.subr.bf16.mxu0 0
    %1624 = vmatpush1.bf16.msra.mxu0 %v905
    %1625 = vmatprep.subr.bf16.mxu0 0
    %1626 = vmatpush1.bf16.msra.mxu0 %v906
    %1627 = vmatprep.subr.bf16.mxu0 0
    %1628 = vmatpush1.bf16.msra.mxu0 %v907
    %1629 = vmatprep.subr.bf16.mxu0 0
    %1630 = vmatpush1.bf16.msra.mxu0 %v908
    %1631 = vmatprep.mubr.bf16.mxu0 %v1529
    %1632 = vmatmul.mubr.bf16.gmra.mrb[0].mxu0 %v1528
    %v1633 = vpop.f32.mrb[0].mxu0
    %v1634 = vadd.f32 %v1593, %v1633
    %v1635 = vpop.f32.mrb[0].mxu0
    %v1636 = vpop.f32.mrb[0].mxu0
    %v1637 = vadd.f32 %v1596, %v1636
    %v1638 = vpop.f32.mrb[0].mxu0
    %1639 = vdwg.mxu0
    %1640 = vmatprep.subr.bf16.mxu0 0
    %1641 = vmatpush1.bf16.msra.mxu0 %v909
    %1642 = vmatprep.subr.bf16.mxu0 0
    %1643 = vmatpush1.bf16.msra.mxu0 %v910
    %1644 = vmatprep.subr.bf16.mxu0 0
    %1645 = vmatpush1.bf16.msra.mxu0 %v911
    %1646 = vmatprep.subr.bf16.mxu0 0
    %1647 = vmatpush1.bf16.msra.mxu0 %v912
    %1648 = vmatprep.subr.bf16.mxu0 0
    %1649 = vmatpush1.bf16.msra.mxu0 %v913
    %1650 = vmatprep.subr.bf16.mxu0 0
    %1651 = vmatpush1.bf16.msra.mxu0 %v914
    %1652 = vmatprep.subr.bf16.mxu0 0
    %1653 = vmatpush1.bf16.msra.mxu0 %v915
    %1654 = vmatprep.subr.bf16.mxu0 0
    %1655 = vmatpush1.bf16.msra.mxu0 %v916
    %1656 = vmatprep.subr.bf16.mxu0 0
    %1657 = vmatpush1.bf16.msra.mxu0 %v917
    %1658 = vmatprep.subr.bf16.mxu0 0
    %1659 = vmatpush1.bf16.msra.mxu0 %v918
    %1660 = vmatprep.subr.bf16.mxu0 0
    %1661 = vmatpush1.bf16.msra.mxu0 %v919
    %1662 = vmatprep.subr.bf16.mxu0 0
    %1663 = vmatpush1.bf16.msra.mxu0 %v920
    %1664 = vmatprep.subr.bf16.mxu0 0
    %1665 = vmatpush1.bf16.msra.mxu0 %v921
    %1666 = vmatprep.subr.bf16.mxu0 0
    %1667 = vmatpush1.bf16.msra.mxu0 %v922
    %1668 = vmatprep.subr.bf16.mxu0 0
    %1669 = vmatpush1.bf16.msra.mxu0 %v923
    %1670 = vmatprep.subr.bf16.mxu0 0
    %1671 = vmatpush1.bf16.msra.mxu0 %v924
    %1672 = vmatprep.mubr.bf16.mxu0 %v1531
    %1673 = vmatmul.mubr.bf16.gmra.mrb[0].mxu0 %v1530
    %v1674 = vpop.f32.mrb[0].mxu0
    %v1675 = vadd.f32 %v1634, %v1674
    %v1676 = vpop.f32.mrb[0].mxu0
    %v1677 = vpop.f32.mrb[0].mxu0
    %v1678 = vadd.f32 %v1637, %v1677
    %v1679 = vpop.f32.mrb[0].mxu0
    %1680 = vdwg.mxu0
    %1681 = vmatprep.subr.bf16.mxu0 0
    %1682 = vmatpush1.bf16.msra.mxu0 %v925
    %1683 = vmatprep.subr.bf16.mxu0 0
    %1684 = vmatpush1.bf16.msra.mxu0 %v926
    %1685 = vmatprep.subr.bf16.mxu0 0
    %1686 = vmatpush1.bf16.msra.mxu0 %v927
    %1687 = vmatprep.subr.bf16.mxu0 0
    %1688 = vmatpush1.bf16.msra.mxu0 %v928
    %1689 = vmatprep.subr.bf16.mxu0 0
    %1690 = vmatpush1.bf16.msra.mxu0 %v929
    %1691 = vmatprep.subr.bf16.mxu0 0
    %1692 = vmatpush1.bf16.msra.mxu0 %v930
    %1693 = vmatprep.subr.bf16.mxu0 0
    %1694 = vmatpush1.bf16.msra.mxu0 %v931
    %1695 = vmatprep.subr.bf16.mxu0 0
    %1696 = vmatpush1.bf16.msra.mxu0 %v932
    %1697 = vmatprep.subr.bf16.mxu0 0
    %1698 = vmatpush1.bf16.msra.mxu0 %v933
    %1699 = vmatprep.subr.bf16.mxu0 0
    %1700 = vmatpush1.bf16.msra.mxu0 %v934
    %1701 = vmatprep.subr.bf16.mxu0 0
    %1702 = vmatpush1.bf16.msra.mxu0 %v935
    %1703 = vmatprep.subr.bf16.mxu0 0
    %1704 = vmatpush1.bf16.msra.mxu0 %v936
    %1705 = vmatprep.subr.bf16.mxu0 0
    %1706 = vmatpush1.bf16.msra.mxu0 %v937
    %1707 = vmatprep.subr.bf16.mxu0 0
    %1708 = vmatpush1.bf16.msra.mxu0 %v938
    %1709 = vmatprep.subr.bf16.mxu0 0
    %1710 = vmatpush1.bf16.msra.mxu0 %v939
    %1711 = vmatprep.subr.bf16.mxu0 0
    %1712 = vmatpush1.bf16.msra.mxu0 %v940
    %1713 = vmatprep.mubr.bf16.mxu0 %v1533
    %1714 = vmatmul.mubr.bf16.gmra.mrb[0].mxu0 %v1532
    %v1715 = vpop.f32.mrb[0].mxu0
    %v1716 = vadd.f32 %v1675, %v1715
    %v1717 = vpop.f32.mrb[0].mxu0
    %v1718 = vpop.f32.mrb[0].mxu0
    %v1719 = vadd.f32 %v1678, %v1718
    %v1720 = vpop.f32.mrb[0].mxu0
    %1721 = vdwg.mxu0
    %1722 = vmatprep.subr.bf16.mxu0 0
    %1723 = vmatpush1.bf16.msra.mxu0 %v941
    %1724 = vmatprep.subr.bf16.mxu0 0
    %1725 = vmatpush1.bf16.msra.mxu0 %v942
    %1726 = vmatprep.subr.bf16.mxu0 0
    %1727 = vmatpush1.bf16.msra.mxu0 %v943
    %1728 = vmatprep.subr.bf16.mxu0 0
    %1729 = vmatpush1.bf16.msra.mxu0 %v944
    %1730 = vmatprep.subr.bf16.mxu0 0
    %1731 = vmatpush1.bf16.msra.mxu0 %v945
    %1732 = vmatprep.subr.bf16.mxu0 0
    %1733 = vmatpush1.bf16.msra.mxu0 %v946
    %1734 = vmatprep.subr.bf16.mxu0 0
    %1735 = vmatpush1.bf16.msra.mxu0 %v947
    %1736 = vmatprep.subr.bf16.mxu0 0
    %1737 = vmatpush1.bf16.msra.mxu0 %v948
    %1738 = vmatprep.subr.bf16.mxu0 0
    %1739 = vmatpush1.bf16.msra.mxu0 %v949
    %1740 = vmatprep.subr.bf16.mxu0 0
    %1741 = vmatpush1.bf16.msra.mxu0 %v950
    %1742 = vmatprep.subr.bf16.mxu0 0
    %1743 = vmatpush1.bf16.msra.mxu0 %v951
    %1744 = vmatprep.subr.bf16.mxu0 0
    %1745 = vmatpush1.bf16.msra.mxu0 %v952
    %1746 = vmatprep.subr.bf16.mxu0 0
    %1747 = vmatpush1.bf16.msra.mxu0 %v953
    %1748 = vmatprep.subr.bf16.mxu0 0
    %1749 = vmatpush1.bf16.msra.mxu0 %v954
    %1750 = vmatprep.subr.bf16.mxu0 0
    %1751 = vmatpush1.bf16.msra.mxu0 %v955
    %1752 = vmatprep.subr.bf16.mxu0 0
    %1753 = vmatpush1.bf16.msra.mxu0 %v956
    %1754 = vmatprep.mubr.bf16.mxu0 %v1535
    %1755 = vmatmul.mubr.bf16.gmra.mrb[0].mxu0 %v1534
    %v1756 = vpop.f32.mrb[0].mxu0
    %v1757 = vadd.f32 %v1716, %v1756
    %v1758 = vpop.f32.mrb[0].mxu0
    %v1759 = vpop.f32.mrb[0].mxu0
    %v1760 = vadd.f32 %v1719, %v1759
    %v1761 = vpop.f32.mrb[0].mxu0
    %1762 = vdwg.mxu0
    %1763 = vmatprep.subr.bf16.mxu0 0
    %1764 = vmatpush1.bf16.msra.mxu0 %v957
    %1765 = vmatprep.subr.bf16.mxu0 0
    %1766 = vmatpush1.bf16.msra.mxu0 %v958
    %1767 = vmatprep.subr.bf16.mxu0 0
    %1768 = vmatpush1.bf16.msra.mxu0 %v959
    %1769 = vmatprep.subr.bf16.mxu0 0
    %1770 = vmatpush1.bf16.msra.mxu0 %v960
    %1771 = vmatprep.subr.bf16.mxu0 0
    %1772 = vmatpush1.bf16.msra.mxu0 %v961
    %1773 = vmatprep.subr.bf16.mxu0 0
    %1774 = vmatpush1.bf16.msra.mxu0 %v962
    %1775 = vmatprep.subr.bf16.mxu0 0
    %1776 = vmatpush1.bf16.msra.mxu0 %v963
    %1777 = vmatprep.subr.bf16.mxu0 0
    %1778 = vmatpush1.bf16.msra.mxu0 %v964
    %1779 = vmatprep.subr.bf16.mxu0 0
    %1780 = vmatpush1.bf16.msra.mxu0 %v965
    %1781 = vmatprep.subr.bf16.mxu0 0
    %1782 = vmatpush1.bf16.msra.mxu0 %v966
    %1783 = vmatprep.subr.bf16.mxu0 0
    %1784 = vmatpush1.bf16.msra.mxu0 %v967
    %1785 = vmatprep.subr.bf16.mxu0 0
    %1786 = vmatpush1.bf16.msra.mxu0 %v968
    %1787 = vmatprep.subr.bf16.mxu0 0
    %1788 = vmatpush1.bf16.msra.mxu0 %v969
    %1789 = vmatprep.subr.bf16.mxu0 0
    %1790 = vmatpush1.bf16.msra.mxu0 %v970
    %1791 = vmatprep.subr.bf16.mxu0 0
    %1792 = vmatpush1.bf16.msra.mxu0 %v971
    %1793 = vmatprep.subr.bf16.mxu0 0
    %1794 = vmatpush1.bf16.msra.mxu0 %v972
    %1795 = vmatprep.mubr.bf16.mxu0 %v1537
    %1796 = vmatmul.mubr.bf16.gmra.mrb[0].mxu0 %v1536
    %v1797 = vpop.f32.mrb[0].mxu0
    %v1798 = vadd.f32 %v1757, %v1797
    %v1799 = vpop.f32.mrb[0].mxu0
    %v1800 = vpop.f32.mrb[0].mxu0
    %v1801 = vadd.f32 %v1760, %v1800
    %v1802 = vpop.f32.mrb[0].mxu0
    %1803 = vdwg.mxu0
    %1804 = vmatprep.subr.bf16.mxu0 0
    %1805 = vmatpush1.bf16.msra.mxu0 %v973
    %1806 = vmatprep.subr.bf16.mxu0 0
    %1807 = vmatpush1.bf16.msra.mxu0 %v974
    %1808 = vmatprep.subr.bf16.mxu0 0
    %1809 = vmatpush1.bf16.msra.mxu0 %v975
    %1810 = vmatprep.subr.bf16.mxu0 0
    %1811 = vmatpush1.bf16.msra.mxu0 %v976
    %1812 = vmatprep.subr.bf16.mxu0 0
    %1813 = vmatpush1.bf16.msra.mxu0 %v977
    %1814 = vmatprep.subr.bf16.mxu0 0
    %1815 = vmatpush1.bf16.msra.mxu0 %v978
    %1816 = vmatprep.subr.bf16.mxu0 0
    %1817 = vmatpush1.bf16.msra.mxu0 %v979
    %1818 = vmatprep.subr.bf16.mxu0 0
    %1819 = vmatpush1.bf16.msra.mxu0 %v980
    %1820 = vmatprep.subr.bf16.mxu0 0
    %1821 = vmatpush1.bf16.msra.mxu0 %v981
    %1822 = vmatprep.subr.bf16.mxu0 0
    %1823 = vmatpush1.bf16.msra.mxu0 %v982
    %1824 = vmatprep.subr.bf16.mxu0 0
    %1825 = vmatpush1.bf16.msra.mxu0 %v983
    %1826 = vmatprep.subr.bf16.mxu0 0
    %1827 = vmatpush1.bf16.msra.mxu0 %v984
    %1828 = vmatprep.subr.bf16.mxu0 0
    %1829 = vmatpush1.bf16.msra.mxu0 %v985
    %1830 = vmatprep.subr.bf16.mxu0 0
    %1831 = vmatpush1.bf16.msra.mxu0 %v986
    %1832 = vmatprep.subr.bf16.mxu0 0
    %1833 = vmatpush1.bf16.msra.mxu0 %v987
    %1834 = vmatprep.subr.bf16.mxu0 0
    %1835 = vmatpush1.bf16.msra.mxu0 %v988
    %1836 = vmatprep.mubr.bf16.mxu0 %v1539
    %1837 = vmatmul.mubr.bf16.gmra.mrb[0].mxu0 %v1538
    %v1838 = vpop.f32.mrb[0].mxu0
    %v1839 = vadd.f32 %v1798, %v1838
    %v1840 = vpop.f32.mrb[0].mxu0
    %v1841 = vpop.f32.mrb[0].mxu0
    %v1842 = vadd.f32 %v1801, %v1841
    %v1843 = vpop.f32.mrb[0].mxu0
    %1844 = vdwg.mxu0
    %1845 = vmatprep.subr.bf16.mxu0 0
    %1846 = vmatpush1.bf16.msra.mxu0 %v989
    %1847 = vmatprep.subr.bf16.mxu0 0
    %1848 = vmatpush1.bf16.msra.mxu0 %v990
    %1849 = vmatprep.subr.bf16.mxu0 0
    %1850 = vmatpush1.bf16.msra.mxu0 %v991
    %1851 = vmatprep.subr.bf16.mxu0 0
    %1852 = vmatpush1.bf16.msra.mxu0 %v992
    %1853 = vmatprep.subr.bf16.mxu0 0
    %1854 = vmatpush1.bf16.msra.mxu0 %v993
    %1855 = vmatprep.subr.bf16.mxu0 0
    %1856 = vmatpush1.bf16.msra.mxu0 %v994
    %1857 = vmatprep.subr.bf16.mxu0 0
    %1858 = vmatpush1.bf16.msra.mxu0 %v995
    %1859 = vmatprep.subr.bf16.mxu0 0
    %1860 = vmatpush1.bf16.msra.mxu0 %v996
    %1861 = vmatprep.subr.bf16.mxu0 0
    %1862 = vmatpush1.bf16.msra.mxu0 %v997
    %1863 = vmatprep.subr.bf16.mxu0 0
    %1864 = vmatpush1.bf16.msra.mxu0 %v998
    %1865 = vmatprep.subr.bf16.mxu0 0
    %1866 = vmatpush1.bf16.msra.mxu0 %v999
    %1867 = vmatprep.subr.bf16.mxu0 0
    %1868 = vmatpush1.bf16.msra.mxu0 %v1000
    %1869 = vmatprep.subr.bf16.mxu0 0
    %1870 = vmatpush1.bf16.msra.mxu0 %v1001
    %1871 = vmatprep.subr.bf16.mxu0 0
    %1872 = vmatpush1.bf16.msra.mxu0 %v1002
    %1873 = vmatprep.subr.bf16.mxu0 0
    %1874 = vmatpush1.bf16.msra.mxu0 %v1003
    %1875 = vmatprep.subr.bf16.mxu0 0
    %1876 = vmatpush1.bf16.msra.mxu0 %v1004
    %1877 = vmatprep.mubr.bf16.mxu0 %v1541
    %1878 = vmatmul.mubr.bf16.gmra.mrb[0].mxu0 %v1540
    %v1879 = vpop.f32.mrb[0].mxu0
    %v1880 = vadd.f32 %v1839, %v1879
    %v1881 = vpop.f32.mrb[0].mxu0
    %v1882 = vpop.f32.mrb[0].mxu0
    %v1883 = vadd.f32 %v1842, %v1882
    %v1884 = vpop.f32.mrb[0].mxu0
    %1885 = vdwg.mxu0
    %v1886 = vmax.f32 %v1455, 0.0
    %v1887 = vmax.f32 %v1458, 0.0
    %v1888 = vmax.f32 %v1880, 0.0
    %v1889 = vmax.f32 %v1883, 0.0
    %v1890 = vadd.f32 %v1886, %v1888
    %v1891 = vadd.f32 %v1887, %v1889
    %1892 = vst [vmem:[#allocation2] sm:$0xff] %v1890
    %1893 = vst [vmem:[#allocation2 + $0x8] sm:$0xff] %v1891
    // Predicated region
    $region10: #{cam_forward.1} parent=1 // pred_check
      _
    $region11: #{cam_forward.1} parent=1 // pred_check_branch
      %1895 = sbr.rel (0) target = $region13
    $region12: #{cam_forward.1} parent=1 // pred_region
      %s1897 = ssub.s32 256, 256
      %1898 = vsyncadd [#allocation3], %s1897
      %s1899 = sshll.u32 [#allocation2], 4
      %s1900 = int_to_ptr.vmem [resolvable:$true] %s1899
      %1905 = dma.vmem_to_hbm [thread:$0]  %s1900, 256, %s2, [#allocation3], 128, 128, 8
    $region13: #{cam_forward.1} parent=1 // pred_fallthru
      _
    // Predicated region
    $region14: #{cam_forward.1} parent=1 // pred_check
      _
    $region15: #{cam_forward.1} parent=1 // pred_check_branch
      %1907 = sbr.rel (0) target = $region17
    $region16: #{cam_forward.1} parent=1 // pred_region
      %1908 = dma.done [#allocation3], 256
    $region17: #{cam_forward.1} parent=1 // pred_fallthru
      _
    %1909 = vsyncpa [#allocation3], 1

</llo_original>
